<compile_context>
chip_gen: v7x
topology: tpu7x:2x2x1
jax: 0.10.0
libtpu: 0.0.40
codegen_flags: <defaults>
</compile_context>

<pallas_src>
import math
import jax
import jax.numpy as jnp
from jax.experimental import pallas as pl
from jax.experimental.pallas import tpu as pltpu

# Small, module-consistent shapes
STATE_SIZE = (16,)     # state_size (1-D state -> Linear head branch)
ACTION_SIZE = 4
LAYER_SIZE = 32        # layer_size
N_COS = 64             # self.n_cos
NUM_TAU = 8            # default num_tau in forward()
BATCH = 2
OUT_PAD = 128          # lane-dense padded output width (>= ACTION_SIZE)


def _round_up(n, m):
    return ((n + m - 1) // m) * m


def iqn_kernel(tau_ref, x_ref, rep_ref, pis_ref,
               wh_ref, bh_ref, wc_ref, bc_ref,
               w1_ref, b1_ref, w2_ref, b2_ref,
               out_ref):
    """Fused IQN forward on one grid step (tile = bt * num_tau rows).

    tau_ref : (tile, 1)   f32   tau, one row per (batch, tau) pair
    x_ref   : (bt, S)     f32   state, one row per batch element
    rep_ref : (tile, bt)  bf16  0/1 expansion matrix, rep[r*T + t, r] = 1
    pis_ref : (1, 64)     f32   pi * [1..64]
    out_ref : (tile, 128) bf16  lane-dense padded quantile output
    """
    f32 = jnp.float32
    bf16 = jnp.bfloat16

    # cos features computed on-chip: cos(tau * pi_i)   -> (tile, 64)
    cos = jnp.cos(tau_ref[...] * pis_ref[...])

    # cos_x = relu(cos_embedding(cos))                  (tile, 64) @ (64, L)
    cx = jnp.maximum(
        jnp.dot(cos.astype(bf16), wc_ref[...], preferred_element_type=f32)
        + bc_ref[...], 0.0)

    # x = relu(head(state)), computed ONCE per batch row   (bt, S) @ (S, L)
    xh = jnp.maximum(
        jnp.dot(x_ref[...].astype(bf16), wh_ref[...], preferred_element_type=f32)
        + bh_ref[...], 0.0)

    # Per-tau expansion: xh_rep[r*T + t] = xh[r], done as a 0/1 selection
    # matmul on the MXU (avoids sublane relayout/reshape)  (tile, bt) @ (bt, L)
    xh_rep = jnp.dot(rep_ref[...], xh.astype(bf16), preferred_element_type=f32)

    # x = x.unsqueeze(1) * cos_x
    mix = xh_rep * cx

    # x = relu(ff_1(x))                                 (tile, L) @ (L, L)
    h1 = jnp.maximum(
        jnp.dot(mix.astype(bf16), w1_ref[...], preferred_element_type=f32)
        + b1_ref[...], 0.0)

    # out = ff_2(x), one unmasked lane-dense store      (tile, L) @ (L, 128)
    out = (jnp.dot(h1.astype(bf16), w2_ref[...], preferred_element_type=f32)
           + b2_ref[...])
    out_ref[...] = out.astype(out_ref.dtype)


def iqn_forward(x, taus, params, *, row_tile=1024):
    """Returns (quantiles (B, T, A), taus (B, T, 1)) matching IQN.forward."""
    B, S = x.shape
    T = taus.shape[1]
    L = params["w1"].shape[0]

    # Batch rows per grid step; rows per step = bt * T (<= ~row_tile).
    # Keep >= 2 grid steps whenever the batch allows (v7x: 2 TensorCores).
    bt_cap = max(8, row_tile // T)
    B8 = _round_up(B, 8)
    bt = min(bt_cap, max(8, _round_up(pl.cdiv(B8, 2), 8)))
    B_pad = _round_up(B8, bt)
    grid = (B_pad // bt,)
    tile = bt * T
    R, R_pad = B * T, B_pad * T

    x_p = x.astype(jnp.float32)
    taus_bt = taus.reshape(B, T).astype(jnp.float32)
    if B_pad != B:
        x_p = jnp.pad(x_p, ((0, B_pad - B), (0, 0)))
        taus_bt = jnp.pad(taus_bt, ((0, B_pad - B), (0, 0)))
    taus_flat = taus_bt.reshape(R_pad, 1)

    # Constant 0/1 expansion matrix: rep[r*T + t, r] = 1.
    rep = jnp.repeat(jnp.eye(bt, dtype=jnp.bfloat16), T, axis=0)   # (tile, bt)

    rows = lambda i: (i, 0)    # row-tiled blocks (taus / state / output)
    const = lambda i: (0, 0)   # weights & constants stay VMEM-resident
    in_specs = [
        pl.BlockSpec((tile, 1), rows),        # taus
        pl.BlockSpec((bt, S), rows),          # state (per batch row)
        pl.BlockSpec((tile, bt), const),      # expansion matrix
        pl.BlockSpec((1, N_COS), const),      # pis
        pl.BlockSpec((S, L), const),          # head
        pl.BlockSpec((1, L), const),
        pl.BlockSpec((N_COS, L), const),      # cos_embedding
        pl.BlockSpec((1, L), const),
        pl.BlockSpec((L, L), const),          # ff_1
        pl.BlockSpec((1, L), const),
        pl.BlockSpec((L, OUT_PAD), const),    # ff_2 (lane-padded)
        pl.BlockSpec((1, OUT_PAD), const),
    ]
    out_spec = pl.BlockSpec((tile, OUT_PAD), rows)

    flops = int(2 * (B_pad * S * L
                     + R_pad * (bt * L + N_COS * L + L * L + L * OUT_PAD)))
    transcendentals = int(R_pad * N_COS)
    bytes_accessed = int(
        4 * R_pad                                           # taus (f32)
        + 4 * B_pad * S                                     # state (f32)
        + 2 * tile * bt                                     # expansion matrix
        + 2 * (S * L + N_COS * L + L * L + L * OUT_PAD)     # bf16 weights
        + 4 * (3 * L + OUT_PAD + N_COS)                     # f32 biases + pis
        + 2 * R_pad * OUT_PAD)                              # bf16 output

    out = pl.pallas_call(
        iqn_kernel,
        grid=grid,
        in_specs=in_specs,
        out_specs=out_spec,
        out_shape=jax.ShapeDtypeStruct((R_pad, OUT_PAD), jnp.bfloat16),
        compiler_params=pltpu.CompilerParams(
            dimension_semantics=("parallel",)),
        cost_estimate=pl.CostEstimate(
            flops=flops, transcendentals=transcendentals,
            bytes_accessed=bytes_accessed),
    )(taus_flat, x_p, rep, params["pis"],
      params["wh_b"], params["bh"], params["wc_b"], params["bc"],
      params["w1_b"], params["b1"], params["w2p_b"], params["b2p"])

    quantiles = out[:R, :ACTION_SIZE].astype(jnp.float32).reshape(B, T, ACTION_SIZE)
    return quantiles, taus


def init_params(key):
    """Deterministic nn.Linear-style init: U(-1/sqrt(fan_in), 1/sqrt(fan_in))."""
    S = STATE_SIZE[0]

    def linear(key, fan_in, fan_out):
        kw, kb = jax.random.split(key)
        bound = 1.0 / math.sqrt(fan_in)
        w = jax.random.uniform(kw, (fan_in, fan_out), jnp.float32, -bound, bound)
        b = jax.random.uniform(kb, (1, fan_out), jnp.float32, -bound, bound)
        return w, b

    k_head, k_cos, k_ff1, k_ff2 = jax.random.split(key, 4)
    wh, bh = linear(k_head, S, LAYER_SIZE)          # head: Linear(S, layer_size)
    wc, bc = linear(k_cos, N_COS, LAYER_SIZE)       # cos_embedding
    w1, b1 = linear(k_ff1, LAYER_SIZE, LAYER_SIZE)  # ff_1
    w2, b2 = linear(k_ff2, LAYER_SIZE, ACTION_SIZE) # ff_2

    # Lane-dense (128-wide) zero-padded ff_2 copies for the kernel.
    w2p = jnp.zeros((LAYER_SIZE, OUT_PAD), jnp.float32).at[:, :ACTION_SIZE].set(w2)
    b2p = jnp.zeros((1, OUT_PAD), jnp.float32).at[:, :ACTION_SIZE].set(b2)

    # pis = pi * [1..64] — matches the PyTorch module (range(1, n_cos + 1)).
    pis = jnp.arange(1, N_COS + 1, dtype=jnp.float32).reshape(1, N_COS) * math.pi

    return dict(
        # f32 master copies (used by the pure-JAX reference)
        wh=wh, bh=bh, wc=wc, bc=bc, w1=w1, b1=b1, w2=w2, b2=b2,
        b2p=b2p, pis=pis,
        # bf16 copies fed to the MXU inside the kernel
        wh_b=wh.astype(jnp.bfloat16), wc_b=wc.astype(jnp.bfloat16),
        w1_b=w1.astype(jnp.bfloat16), w2p_b=w2p.astype(jnp.bfloat16),
    )


def iqn_reference(x, taus, params):
    """Pure-JAX f32 reference mirroring IQN.forward (vector-state branch)."""
    B, T = taus.shape[0], taus.shape[1]
    xh = jax.nn.relu(x @ params["wh"] + params["bh"])                   # (B, L)
    cos = jnp.cos(taus * params["pis"].reshape(1, 1, N_COS))            # (B, T, 64)
    cx = jax.nn.relu(cos.reshape(B * T, N_COS) @ params["wc"] + params["bc"])
    cx = cx.reshape(B, T, LAYER_SIZE)
    mix = (xh[:, None, :] * cx).reshape(B * T, LAYER_SIZE)
    h1 = jax.nn.relu(mix @ params["w1"] + params["b1"])
    out = h1 @ params["w2"] + params["b2"]
    return out.reshape(B, T, ACTION_SIZE)


if __name__ == "__main__":
    key = jax.random.PRNGKey(0)
    k_x, k_tau, k_p, k_x2, k_tau2, k_x3, k_tau3 = jax.random.split(key, 7)
    params = init_params(k_p)

    # bf16 MXU inputs / bf16 output => compare with a loosened tolerance.
    ATOL = 5e-2
    RTOL = 5e-2

    # Small module-consistent shapes (single grid step, batch padding path).
    x = jax.random.normal(k_x, (BATCH, STATE_SIZE[0]), jnp.float32)
    taus = jax.random.uniform(k_tau, (BATCH, NUM_TAU, 1), jnp.float32)
    quantiles, taus_out = iqn_forward(x, taus, params)
    quantiles = jax.block_until_ready(quantiles)
    ref = iqn_reference(x, taus, params)
    assert quantiles.shape == (BATCH, NUM_TAU, ACTION_SIZE)
    assert taus_out.shape == (BATCH, NUM_TAU, 1)
    assert jnp.allclose(quantiles, ref, atol=ATOL, rtol=RTOL), "mismatch vs reference"

    # Larger batch: exercises the multi-step parallel grid (bt=32, grid=2).
    xb = jax.random.normal(k_x2, (64, STATE_SIZE[0]), jnp.float32)
    tausb = jax.random.uniform(k_tau2, (64, NUM_TAU, 1), jnp.float32)
    qb, _ = iqn_forward(xb, tausb, params)
    qb = jax.block_until_ready(qb)
    refb = iqn_reference(xb, tausb, params)
    assert jnp.allclose(qb, refb, atol=ATOL, rtol=RTOL), "mismatch vs reference (gridded)"

    # Odd batch: exercises batch padding together with a multi-step grid.
    xc = jax.random.normal(k_x3, (50, STATE_SIZE[0]), jnp.float32)
    tausc = jax.random.uniform(k_tau3, (50, NUM_TAU, 1), jnp.float32)
    qc, _ = iqn_forward(xc, tausc, params)
    qc = jax.block_until_ready(qc)
    refc = iqn_reference(xc, tausc, params)
    assert jnp.allclose(qc, refc, atol=ATOL, rtol=RTOL), "mismatch vs reference (padded)"

    print("KERNEL_OK")
</pallas_src>

<mosaic_0001>
module attributes {stable_mosaic.version = 11 : i64} {
  func.func @iqn_kernel(%arg0: i32, %arg1: memref<64x1xf32, #tpu.memory_space<vmem>>, %arg2: memref<8x16xf32, #tpu.memory_space<vmem>>, %arg3: memref<64x8xbf16, #tpu.memory_space<vmem>>, %arg4: memref<1x64xf32, #tpu.memory_space<vmem>>, %arg5: memref<16x32xbf16, #tpu.memory_space<vmem>>, %arg6: memref<1x32xf32, #tpu.memory_space<vmem>>, %arg7: memref<64x32xbf16, #tpu.memory_space<vmem>>, %arg8: memref<1x32xf32, #tpu.memory_space<vmem>>, %arg9: memref<32x32xbf16, #tpu.memory_space<vmem>>, %arg10: memref<1x32xf32, #tpu.memory_space<vmem>>, %arg11: memref<32x128xbf16, #tpu.memory_space<vmem>>, %arg12: memref<1x128xf32, #tpu.memory_space<vmem>>, %arg13: memref<64x128xbf16, #tpu.memory_space<vmem>>) attributes {dimension_semantics = [#tpu.dimension_semantics<parallel>], iteration_bounds = array<i64: 1>, scalar_prefetch = 0 : i64, scratch_operands = 0 : i64, tpu.core_type = #tpu.core_type<tc>, window_params = [{transform_indices = @transform_0, window_bounds = array<i64: 64, 1>}, {transform_indices = @transform_1, window_bounds = array<i64: 8, 16>}, {pipeline_mode = #tpu.pipeline_mode<synchronous>, transform_indices = @transform_2, window_bounds = array<i64: 64, 8>}, {pipeline_mode = #tpu.pipeline_mode<synchronous>, transform_indices = @transform_3, window_bounds = array<i64: 1, 64>}, {pipeline_mode = #tpu.pipeline_mode<synchronous>, transform_indices = @transform_4, window_bounds = array<i64: 16, 32>}, {pipeline_mode = #tpu.pipeline_mode<synchronous>, transform_indices = @transform_5, window_bounds = array<i64: 1, 32>}, {pipeline_mode = #tpu.pipeline_mode<synchronous>, transform_indices = @transform_6, window_bounds = array<i64: 64, 32>}, {pipeline_mode = #tpu.pipeline_mode<synchronous>, transform_indices = @transform_7, window_bounds = array<i64: 1, 32>}, {pipeline_mode = #tpu.pipeline_mode<synchronous>, transform_indices = @transform_8, window_bounds = array<i64: 32, 32>}, {pipeline_mode = #tpu.pipeline_mode<synchronous>, transform_indices = @transform_9, window_bounds = array<i64: 1, 32>}, {pipeline_mode = #tpu.pipeline_mode<synchronous>, transform_indices = @transform_10, window_bounds = array<i64: 32, 128>}, {pipeline_mode = #tpu.pipeline_mode<synchronous>, transform_indices = @transform_11, window_bounds = array<i64: 1, 128>}, {transform_indices = @transform_12, window_bounds = array<i64: 64, 128>}]} {
    %c0 = arith.constant 0 : index
    %c0_0 = arith.constant 0 : index
    %0 = vector.load %arg1[%c0, %c0_0] : memref<64x1xf32, #tpu.memory_space<vmem>>, vector<64x1xf32>
    %c0_1 = arith.constant 0 : index
    %c0_2 = arith.constant 0 : index
    %1 = vector.load %arg4[%c0_1, %c0_2] : memref<1x64xf32, #tpu.memory_space<vmem>>, vector<1x64xf32>
    %2 = vector.broadcast %0 : vector<64x1xf32> to vector<64x64xf32>
    %3 = vector.broadcast %1 : vector<1x64xf32> to vector<64x64xf32>
    %4 = arith.mulf %2, %3 : vector<64x64xf32>
    %5 = math.cos %4 : vector<64x64xf32>
    %6 = arith.truncf %5 : vector<64x64xf32> to vector<64x64xbf16>
    %c0_3 = arith.constant 0 : index
    %c0_4 = arith.constant 0 : index
    %7 = vector.load %arg7[%c0_3, %c0_4] : memref<64x32xbf16, #tpu.memory_space<vmem>>, vector<64x32xbf16>
    %cst = arith.constant dense<0.000000e+00> : vector<64x32xf32>
    %8 = tpu.matmul %6, %7, %cst {dimension_numbers = #tpu.dot_dimension_numbers<[1], [0], [0], [1], [0, 0, 1, 1], [], []>} : vector<64x64xbf16>, vector<64x32xbf16>, vector<64x32xf32> -> vector<64x32xf32>
    %c0_5 = arith.constant 0 : index
    %c0_6 = arith.constant 0 : index
    %9 = vector.load %arg8[%c0_5, %c0_6] : memref<1x32xf32, #tpu.memory_space<vmem>>, vector<1x32xf32>
    %10 = vector.broadcast %9 : vector<1x32xf32> to vector<64x32xf32>
    %11 = arith.addf %8, %10 : vector<64x32xf32>
    %cst_7 = arith.constant 0.000000e+00 : f32
    %12 = vector.broadcast %cst_7 : f32 to vector<64x32xf32>
    %13 = arith.maximumf %11, %12 : vector<64x32xf32>
    %c0_8 = arith.constant 0 : index
    %c0_9 = arith.constant 0 : index
    %14 = vector.load %arg2[%c0_8, %c0_9] : memref<8x16xf32, #tpu.memory_space<vmem>>, vector<8x16xf32>
    %15 = arith.truncf %14 : vector<8x16xf32> to vector<8x16xbf16>
    %c0_10 = arith.constant 0 : index
    %c0_11 = arith.constant 0 : index
    %16 = vector.load %arg5[%c0_10, %c0_11] : memref<16x32xbf16, #tpu.memory_space<vmem>>, vector<16x32xbf16>
    %cst_12 = arith.constant dense<0.000000e+00> : vector<8x32xf32>
    %17 = tpu.matmul %15, %16, %cst_12 {dimension_numbers = #tpu.dot_dimension_numbers<[1], [0], [0], [1], [0, 0, 1, 1], [], []>} : vector<8x16xbf16>, vector<16x32xbf16>, vector<8x32xf32> -> vector<8x32xf32>
    %c0_13 = arith.constant 0 : index
    %c0_14 = arith.constant 0 : index
    %18 = vector.load %arg6[%c0_13, %c0_14] : memref<1x32xf32, #tpu.memory_space<vmem>>, vector<1x32xf32>
    %19 = vector.broadcast %18 : vector<1x32xf32> to vector<8x32xf32>
    %20 = arith.addf %17, %19 : vector<8x32xf32>
    %cst_15 = arith.constant 0.000000e+00 : f32
    %21 = vector.broadcast %cst_15 : f32 to vector<8x32xf32>
    %22 = arith.maximumf %20, %21 : vector<8x32xf32>
    %c0_16 = arith.constant 0 : index
    %c0_17 = arith.constant 0 : index
    %23 = vector.load %arg3[%c0_16, %c0_17] : memref<64x8xbf16, #tpu.memory_space<vmem>>, vector<64x8xbf16>
    %24 = arith.truncf %22 : vector<8x32xf32> to vector<8x32xbf16>
    %cst_18 = arith.constant dense<0.000000e+00> : vector<64x32xf32>
    %25 = tpu.matmul %23, %24, %cst_18 {dimension_numbers = #tpu.dot_dimension_numbers<[1], [0], [0], [1], [0, 0, 1, 1], [], []>} : vector<64x8xbf16>, vector<8x32xbf16>, vector<64x32xf32> -> vector<64x32xf32>
    %26 = arith.mulf %25, %13 : vector<64x32xf32>
    %27 = arith.truncf %26 : vector<64x32xf32> to vector<64x32xbf16>
    %c0_19 = arith.constant 0 : index
    %c0_20 = arith.constant 0 : index
    %28 = vector.load %arg9[%c0_19, %c0_20] : memref<32x32xbf16, #tpu.memory_space<vmem>>, vector<32x32xbf16>
    %cst_21 = arith.constant dense<0.000000e+00> : vector<64x32xf32>
    %29 = tpu.matmul %27, %28, %cst_21 {dimension_numbers = #tpu.dot_dimension_numbers<[1], [0], [0], [1], [0, 0, 1, 1], [], []>} : vector<64x32xbf16>, vector<32x32xbf16>, vector<64x32xf32> -> vector<64x32xf32>
    %c0_22 = arith.constant 0 : index
    %c0_23 = arith.constant 0 : index
    %30 = vector.load %arg10[%c0_22, %c0_23] : memref<1x32xf32, #tpu.memory_space<vmem>>, vector<1x32xf32>
    %31 = vector.broadcast %30 : vector<1x32xf32> to vector<64x32xf32>
    %32 = arith.addf %29, %31 : vector<64x32xf32>
    %cst_24 = arith.constant 0.000000e+00 : f32
    %33 = vector.broadcast %cst_24 : f32 to vector<64x32xf32>
    %34 = arith.maximumf %32, %33 : vector<64x32xf32>
    %35 = arith.truncf %34 : vector<64x32xf32> to vector<64x32xbf16>
    %c0_25 = arith.constant 0 : index
    %c0_26 = arith.constant 0 : index
    %36 = vector.load %arg11[%c0_25, %c0_26] : memref<32x128xbf16, #tpu.memory_space<vmem>>, vector<32x128xbf16>
    %cst_27 = arith.constant dense<0.000000e+00> : vector<64x128xf32>
    %37 = tpu.matmul %35, %36, %cst_27 {dimension_numbers = #tpu.dot_dimension_numbers<[1], [0], [0], [1], [0, 0, 1, 1], [], []>} : vector<64x32xbf16>, vector<32x128xbf16>, vector<64x128xf32> -> vector<64x128xf32>
    %c0_28 = arith.constant 0 : index
    %c0_29 = arith.constant 0 : index
    %38 = vector.load %arg12[%c0_28, %c0_29] : memref<1x128xf32, #tpu.memory_space<vmem>>, vector<1x128xf32>
    %39 = vector.broadcast %38 : vector<1x128xf32> to vector<64x128xf32>
    %40 = arith.addf %37, %39 : vector<64x128xf32>
    %41 = arith.truncf %40 : vector<64x128xf32> to vector<64x128xbf16>
    %c0_30 = arith.constant 0 : index
    %c0_31 = arith.constant 0 : index
    %42 = vector.load %arg13[%c0_30, %c0_31] : memref<64x128xbf16, #tpu.memory_space<vmem>>, vector<64x128xbf16>
    tpu.vector_store %arg13[%c0_30, %c0_31], %41 {strides = array<i32>} : memref<64x128xbf16, #tpu.memory_space<vmem>>, vector<64x128xbf16>,
    return
  }
  func.func @transform_0(%arg0: i32) -> (i32, i32) {
    %c0_i32 = arith.constant 0 : i32
    %c0_i32_0 = arith.constant 0 : i32
    return %arg0, %c0_i32 : i32, i32
  }
  func.func @transform_1(%arg0: i32) -> (i32, i32) {
    %c0_i32 = arith.constant 0 : i32
    %c0_i32_0 = arith.constant 0 : i32
    return %arg0, %c0_i32 : i32, i32
  }
  func.func @transform_2(%arg0: i32) -> (i32, i32) {
    %c0_i32 = arith.constant 0 : i32
    %c0_i32_0 = arith.constant 0 : i32
    %c0_i32_1 = arith.constant 0 : i32
    return %c0_i32, %c0_i32_0 : i32, i32
  }
  func.func @transform_3(%arg0: i32) -> (i32, i32) {
    %c0_i32 = arith.constant 0 : i32
    %c0_i32_0 = arith.constant 0 : i32
    %c0_i32_1 = arith.constant 0 : i32
    return %c0_i32, %c0_i32_0 : i32, i32
  }
  func.func @transform_4(%arg0: i32) -> (i32, i32) {
    %c0_i32 = arith.constant 0 : i32
    %c0_i32_0 = arith.constant 0 : i32
    %c0_i32_1 = arith.constant 0 : i32
    return %c0_i32, %c0_i32_0 : i32, i32
  }
  func.func @transform_5(%arg0: i32) -> (i32, i32) {
    %c0_i32 = arith.constant 0 : i32
    %c0_i32_0 = arith.constant 0 : i32
    %c0_i32_1 = arith.constant 0 : i32
    return %c0_i32, %c0_i32_0 : i32, i32
  }
  func.func @transform_6(%arg0: i32) -> (i32, i32) {
    %c0_i32 = arith.constant 0 : i32
    %c0_i32_0 = arith.constant 0 : i32
    %c0_i32_1 = arith.constant 0 : i32
    return %c0_i32, %c0_i32_0 : i32, i32
  }
  func.func @transform_7(%arg0: i32) -> (i32, i32) {
    %c0_i32 = arith.constant 0 : i32
    %c0_i32_0 = arith.constant 0 : i32
    %c0_i32_1 = arith.constant 0 : i32
    return %c0_i32, %c0_i32_0 : i32, i32
  }
  func.func @transform_8(%arg0: i32) -> (i32, i32) {
    %c0_i32 = arith.constant 0 : i32
    %c0_i32_0 = arith.constant 0 : i32
    %c0_i32_1 = arith.constant 0 : i32
    return %c0_i32, %c0_i32_0 : i32, i32
  }
  func.func @transform_9(%arg0: i32) -> (i32, i32) {
    %c0_i32 = arith.constant 0 : i32
    %c0_i32_0 = arith.constant 0 : i32
    %c0_i32_1 = arith.constant 0 : i32
    return %c0_i32, %c0_i32_0 : i32, i32
  }
  func.func @transform_10(%arg0: i32) -> (i32, i32) {
    %c0_i32 = arith.constant 0 : i32
    %c0_i32_0 = arith.constant 0 : i32
    %c0_i32_1 = arith.constant 0 : i32
    return %c0_i32, %c0_i32_0 : i32, i32
  }
  func.func @transform_11(%arg0: i32) -> (i32, i32) {
    %c0_i32 = arith.constant 0 : i32
    %c0_i32_0 = arith.constant 0 : i32
    %c0_i32_1 = arith.constant 0 : i32
    return %c0_i32, %c0_i32_0 : i32, i32
  }
  func.func @transform_12(%arg0: i32) -> (i32, i32) {
    %c0_i32 = arith.constant 0 : i32
    %c0_i32_0 = arith.constant 0 : i32
    return %arg0, %c0_i32 : i32, i32
  }
}

</mosaic_0001>

<llo_original>
// kernel: tpu_custom_call.1
$region0: #{tpu_custom_call.1}
  #allocation0 [shape = 'u32[]', space=smem, size = 0x4, offset = 0x4, fixed_abs, tag = 'smem constant byte address 0x4 - core index']
  #allocation1 [shape = 'u32[144,128]{1,0:T(1,128)}', space=vmem, size = 0x12000, scoped, tag = 'internal scratch']
  %s0 = inlined_call_operand.vmem [shape: f32[64,1], index: 0, kind: input, shape index: {}]
  %s1 = inlined_call_operand.vmem [shape: f32[8,16], index: 1, kind: input, shape index: {}]
  %s2 = inlined_call_operand.vmem [shape: bf16[64,8], index: 2, kind: input, shape index: {}]
  %s3 = inlined_call_operand.vmem [shape: f32[1,64], index: 3, kind: input, shape index: {}]
  %s4 = inlined_call_operand.vmem [shape: bf16[16,32], index: 4, kind: input, shape index: {}]
  %s5 = inlined_call_operand.vmem [shape: f32[1,32], index: 5, kind: input, shape index: {}]
  %s6 = inlined_call_operand.vmem [shape: bf16[64,32], index: 6, kind: input, shape index: {}]
  %s7 = inlined_call_operand.vmem [shape: f32[1,32], index: 7, kind: input, shape index: {}]
  %s8 = inlined_call_operand.vmem [shape: bf16[32,32], index: 8, kind: input, shape index: {}]
  %s9 = inlined_call_operand.vmem [shape: f32[1,32], index: 9, kind: input, shape index: {}]
  %s10 = inlined_call_operand.vmem [shape: bf16[32,128], index: 10, kind: input, shape index: {}]
  %s11 = inlined_call_operand.vmem [shape: f32[1,128], index: 11, kind: input, shape index: {}]
  %s12 = inlined_call_operand.hbm [shape: bf16[64,128], index: 12, kind: output, shape index: {}]
  %s13 = sld [smem:[#allocation0]]
  $region58: #{tpu_custom_call.1} parent=0
    _
  %s15 = ssub.s32 1, %s13
  %s16 = scalar_select 0, %s15, %s13
  $region1: #{tpu_custom_call.1} parent=0
    #allocation2 [shape = 'u8[16384]{0}', space=vmem, size = 0x4000, scoped, tag = 'output window, operand 0, single buffered']
    #allocation3 [shape = 's32[1]{0}', space=sflag, size = 0x4, scoped, tag = 'scoped memory for tpu_custom_call.1']
    %17 = vsyncpa [#allocation3], 0
    // Predicated region
    $region2: #{tpu_custom_call.1} parent=1 // pred_check
      _
    $region3: #{tpu_custom_call.1} parent=1 // pred_check_branch
      %19 = sbr.rel (0) target = $region5
    $region4: #{tpu_custom_call.1} parent=1 // pred_region
      _
    $region5: #{tpu_custom_call.1} parent=1 // pred_fallthru
      _
    // Predicated region
    $region6: #{tpu_custom_call.1} parent=1 // pred_check
      _
    $region7: #{tpu_custom_call.1} parent=1 // pred_check_branch
      %21 = sbr.rel (0) target = $region9
    $region8: #{tpu_custom_call.1} parent=1 // pred_region
      _
    $region9: #{tpu_custom_call.1} parent=1 // pred_fallthru
      _
    // Predicated region
    $region10: #{tpu_custom_call.1} parent=1 // pred_check
      _
    $region11: #{tpu_custom_call.1} parent=1 // pred_check_branch
      %23 = sbr.rel (0) target = $region13
    $region12: #{tpu_custom_call.1} parent=1 // pred_region
      _
    $region13: #{tpu_custom_call.1} parent=1 // pred_fallthru
      _
    // Predicated region
    $region14: #{tpu_custom_call.1} parent=1 // pred_check
      _
    $region15: #{tpu_custom_call.1} parent=1 // pred_check_branch
      %25 = sbr.rel (0) target = $region17
    $region16: #{tpu_custom_call.1} parent=1 // pred_region
      _
    $region17: #{tpu_custom_call.1} parent=1 // pred_fallthru
      _
    // Predicated region
    $region18: #{tpu_custom_call.1} parent=1 // pred_check
      _
    $region19: #{tpu_custom_call.1} parent=1 // pred_check_branch
      %27 = sbr.rel (0) target = $region21
    $region20: #{tpu_custom_call.1} parent=1 // pred_region
      _
    $region21: #{tpu_custom_call.1} parent=1 // pred_fallthru
      _
    // Predicated region
    $region22: #{tpu_custom_call.1} parent=1 // pred_check
      _
    $region23: #{tpu_custom_call.1} parent=1 // pred_check_branch
      %29 = sbr.rel (0) target = $region25
    $region24: #{tpu_custom_call.1} parent=1 // pred_region
      _
    $region25: #{tpu_custom_call.1} parent=1 // pred_fallthru
      _
    // Predicated region
    $region26: #{tpu_custom_call.1} parent=1 // pred_check
      _
    $region27: #{tpu_custom_call.1} parent=1 // pred_check_branch
      %31 = sbr.rel (0) target = $region29
    $region28: #{tpu_custom_call.1} parent=1 // pred_region
      _
    $region29: #{tpu_custom_call.1} parent=1 // pred_fallthru
      _
    // Predicated region
    $region30: #{tpu_custom_call.1} parent=1 // pred_check
      _
    $region31: #{tpu_custom_call.1} parent=1 // pred_check_branch
      %33 = sbr.rel (0) target = $region33
    $region32: #{tpu_custom_call.1} parent=1 // pred_region
      _
    $region33: #{tpu_custom_call.1} parent=1 // pred_fallthru
      _
    // Predicated region
    $region34: #{tpu_custom_call.1} parent=1 // pred_check
      _
    $region35: #{tpu_custom_call.1} parent=1 // pred_check_branch
      %35 = sbr.rel (0) target = $region37
    $region36: #{tpu_custom_call.1} parent=1 // pred_region
      _
    $region37: #{tpu_custom_call.1} parent=1 // pred_fallthru
      _
    // Predicated region
    $region38: #{tpu_custom_call.1} parent=1 // pred_check
      _
    $region39: #{tpu_custom_call.1} parent=1 // pred_check_branch
      %37 = sbr.rel (0) target = $region41
    $region40: #{tpu_custom_call.1} parent=1 // pred_region
      _
    $region41: #{tpu_custom_call.1} parent=1 // pred_fallthru
      _
    // Predicated region
    $region42: #{tpu_custom_call.1} parent=1 // pred_check
      _
    $region43: #{tpu_custom_call.1} parent=1 // pred_check_branch
      %39 = sbr.rel (0) target = $region45
    $region44: #{tpu_custom_call.1} parent=1 // pred_region
      _
    $region45: #{tpu_custom_call.1} parent=1 // pred_fallthru
      _
    // Predicated region
    $region46: #{tpu_custom_call.1} parent=1 // pred_check
      _
    $region47: #{tpu_custom_call.1} parent=1 // pred_check_branch
      %41 = sbr.rel (0) target = $region49
    $region48: #{tpu_custom_call.1} parent=1 // pred_region
      _
    $region49: #{tpu_custom_call.1} parent=1 // pred_fallthru
      _
    %v43 = vld [vmem:[%s0] sm:$0xff]
    %v44 = vld [vmem:[%s0 + $0x8] sm:$0xff]
    %v45 = vld [vmem:[%s0 + $0x10] sm:$0xff]
    %v46 = vld [vmem:[%s0 + $0x18] sm:$0xff]
    %v47 = vld [vmem:[%s0 + $0x20] sm:$0xff]
    %v48 = vld [vmem:[%s0 + $0x28] sm:$0xff]
    %v49 = vld [vmem:[%s0 + $0x30] sm:$0xff]
    %v50 = vld [vmem:[%s0 + $0x38] sm:$0xff]
    %v51 = vld [vmem:[%s3] sm:$0x1]
    %53 = vset.pattern.permute.xlu0 0
    %54 = vperm.xlu0 %53, %v43
    %v55 = vpop.permute.xlu0 %54
    %58 = vset.pattern.permute.xlu0 0
    %59 = vperm.xlu0 %58, %v44
    %v60 = vpop.permute.xlu0 %59
    %63 = vset.pattern.permute.xlu0 0
    %64 = vperm.xlu0 %63, %v45
    %v65 = vpop.permute.xlu0 %64
    %68 = vset.pattern.permute.xlu0 0
    %69 = vperm.xlu0 %68, %v46
    %v70 = vpop.permute.xlu0 %69
    %73 = vset.pattern.permute.xlu0 0
    %74 = vperm.xlu0 %73, %v47
    %v75 = vpop.permute.xlu0 %74
    %78 = vset.pattern.permute.xlu0 0
    %79 = vperm.xlu0 %78, %v48
    %v80 = vpop.permute.xlu0 %79
    %83 = vset.pattern.permute.xlu0 0
    %84 = vperm.xlu0 %83, %v49
    %v85 = vpop.permute.xlu0 %84
    %88 = vset.pattern.permute.xlu0 0
    %89 = vperm.xlu0 %88, %v50
    %v90 = vpop.permute.xlu0 %89
    %v93 = vlaneseq
    %v94 = vshrl.u32 %v93, 7
    %v95 = vsub.s32 0, %v94
    %v96 = vrot.slane %v51, %v95
    %v98 = vmul.f32 %v55, %v96
    %v99 = vmul.f32 %v60, %v96
    %v100 = vmul.f32 %v65, %v96
    %v101 = vmul.f32 %v70, %v96
    %v102 = vmul.f32 %v75, %v96
    %v103 = vmul.f32 %v80, %v96
    %v104 = vmul.f32 %v85, %v96
    %v105 = vmul.f32 %v90, %v96
    %v106 = vand.u32 2147483647, %v98
    %vm107 = vcmp.le.f32.partialorder %v106, 0.7853982
    %vm108 = vcmp.lt.s32.totalorder %v98, 0
    %v109 = vand.u32 %v98, 2139095040
    %v110 = vshrl.u32 %v109, 23
    %v111 = vsub.s32 %v110, 127
    %v112 = vand.u32 2147483647, %v98
    %v113 = vand.u32 %v112, 8388607
    %v114 = vor.u32 %v113, 8388608
    %v115 = vsub.s32 0, %v114
    %v116 = vadd.s32 %v111, 1
    %vm117 = vcmp.gt.s32.totalorder %v116, 0
    %v118 = vsel %vm117, %v116, 0
    %v119 = vshrl.u32 %v118, 5
    %v120 = vand.u32 %v118, 31
    %v121 = vsub.s32 32, %v120
    %v122 = vshrl.u32 683565275, %v121
    %v123 = vshll.u32 683565275, %v120
    %v124 = vshrl.u32 2475754826, %v121
    %v125 = vor.u32 %v123, %v124
    %v126 = vshll.u32 2475754826, %v120
    %v127 = vshrl.u32 2131351028, %v121
    %v128 = vor.u32 %v126, %v127
    %v129 = vshll.u32 2131351028, %v120
    %v130 = vshrl.u32 2102212464, %v121
    %v131 = vor.u32 %v129, %v130
    %v132 = vshll.u32 2102212464, %v120
    %v133 = vshrl.u32 920167782, %v121
    %v134 = vor.u32 %v132, %v133
    %v135 = vshll.u32 920167782, %v120
    %v136 = vshrl.u32 1326507024, %v121
    %v137 = vor.u32 %v135, %v136
    %vm138 = vcmp.lt.s32.totalorder %v119, 1
    %vm139 = vcmp.lt.s32.totalorder %v119, 2
    %vm140 = vcmp.lt.s32.totalorder %v119, 3
    %vm141 = vcmp.lt.s32.totalorder %v119, 4
    %v142 = vsel %vm138, %v122, %v125
    %v143 = vsel %vm141, %v131, 2102212464
    %v144 = vsel %vm140, %v128, %v143
    %v145 = vsel %vm139, %v142, %v144
    %v146 = vsel %vm138, %v125, %v128
    %v147 = vsel %vm141, %v134, 920167782
    %v148 = vsel %vm140, %v131, %v147
    %v149 = vsel %vm139, %v146, %v148
    %v150 = vsel %vm138, %v128, %v131
    %v151 = vsel %vm141, %v137, 1326507024
    %v152 = vsel %vm140, %v134, %v151
    %v153 = vsel %vm139, %v150, %v152
    %v154 = vshll.u32 %v114, 8
    %v155 = vmul.u32.u64.compose %v154, %v153
    %v156 = vextract.low.u32 %v155
    %v157 = vextract.high.u32 %v155
    %v158 = vmul.u32.u64.compose %v154, %v149
    %v159 = vextract.low.u32 %v158
    %v160 = vextract.high.u32 %v158
    %v161 = vmul.u32 %v154, %v145
    %v162 = vadd.s32 %v157, %v159
    %vm163 = vc.u32 %v157, %v159
    %v164 = vadd.s32 %v160, 1
    %v165 = vsel %vm163, %v164, %v160
    %v166 = vadd.s32 %v161, %v165
    %v167 = vadd.s32 %v166, 536870912
    %v168 = vshrl.u32 %v167, 30
    %v169 = vshll.u32 %v168, 30
    %v170 = vsub.s32 %v166, %v169
    %vm171 = vcmp.lt.s32.totalorder %v170, 0
    %v172 = vsub.s32 0, %v170
    %v173 = vsel %vm171, %v172, %v170
    %v174 = vclz %v173
    %v175 = vsub.s32 %v174, 2
    %vm176 = vcmp.gt.s32.totalorder 0, %v175
    %v177 = vsel %vm176, 0, %v175
    %v178 = vsub.s32 32, %v177
    %v179 = vshll.u32 %v170, %v177
    %v180 = vshrl.u32 %v162, %v178
    %v181 = vor.u32 %v179, %v180
    %v182 = vsub.s32 4294967266, %v177
    %v183 = vadd.s32 %v182, 127
    %v184 = vshll.u32 %v183, 23
    %v185 = vor.u32 4788187, %v184
    %v186 = vand.u32 2147483647, %v185
    %v188 = vcvt.s32.f32 %v181
    %v189 = vmul.f32 %v188, %v186
    %v190 = vxor.u32 %v189, 2147483648
    %v191 = vsel %vm108, %v190, %v189
    %v192 = vsub.s32 4, %v168
    %v193 = vsel %vm108, %v192, %v168
    %v194 = vsel %vm107, %v98, %v191
    %v195 = vsel %vm107, 0, %v193
    %v196 = vcosq.f32.pop %v194
    %v197 = vsinq.f32.pop %v194
    %vm198 = vweird.f32 %v98
    %v199 = vand.u32 %v195, 3
    %vm200 = vcmp.lt.s32.totalorder %v199, 2
    %vm201 = vcmp.eq.s32.totalorder %v199, 0
    %v202 = vxor.u32 %v197, 2147483648
    %v203 = vsel %vm201, %v196, %v202
    %vm204 = vcmp.eq.s32.totalorder %v199, 2
    %v205 = vxor.u32 %v196, 2147483648
    %v206 = vsel %vm204, %v205, %v197
    %v207 = vsel %vm200, %v203, %v206
    %v208 = vsel %vm198, nan, %v207
    %v209 = vand.u32 2147483647, %v99
    %vm210 = vcmp.le.f32.partialorder %v209, 0.7853982
    %vm211 = vcmp.lt.s32.totalorder %v99, 0
    %v212 = vand.u32 %v99, 2139095040
    %v213 = vshrl.u32 %v212, 23
    %v214 = vsub.s32 %v213, 127
    %v215 = vand.u32 2147483647, %v99
    %v216 = vand.u32 %v215, 8388607
    %v217 = vor.u32 %v216, 8388608
    %v218 = vsub.s32 0, %v217
    %v219 = vadd.s32 %v214, 1
    %vm220 = vcmp.gt.s32.totalorder %v219, 0
    %v221 = vsel %vm220, %v219, 0
    %v222 = vshrl.u32 %v221, 5
    %v223 = vand.u32 %v221, 31
    %v224 = vsub.s32 32, %v223
    %v225 = vshrl.u32 683565275, %v224
    %v226 = vshll.u32 683565275, %v223
    %v227 = vshrl.u32 2475754826, %v224
    %v228 = vor.u32 %v226, %v227
    %v229 = vshll.u32 2475754826, %v223
    %v230 = vshrl.u32 2131351028, %v224
    %v231 = vor.u32 %v229, %v230
    %v232 = vshll.u32 2131351028, %v223
    %v233 = vshrl.u32 2102212464, %v224
    %v234 = vor.u32 %v232, %v233
    %v235 = vshll.u32 2102212464, %v223
    %v236 = vshrl.u32 920167782, %v224
    %v237 = vor.u32 %v235, %v236
    %v238 = vshll.u32 920167782, %v223
    %v239 = vshrl.u32 1326507024, %v224
    %v240 = vor.u32 %v238, %v239
    %vm241 = vcmp.lt.s32.totalorder %v222, 1
    %vm242 = vcmp.lt.s32.totalorder %v222, 2
    %vm243 = vcmp.lt.s32.totalorder %v222, 3
    %vm244 = vcmp.lt.s32.totalorder %v222, 4
    %v245 = vsel %vm241, %v225, %v228
    %v246 = vsel %vm244, %v234, 2102212464
    %v247 = vsel %vm243, %v231, %v246
    %v248 = vsel %vm242, %v245, %v247
    %v249 = vsel %vm241, %v228, %v231
    %v250 = vsel %vm244, %v237, 920167782
    %v251 = vsel %vm243, %v234, %v250
    %v252 = vsel %vm242, %v249, %v251
    %v253 = vsel %vm241, %v231, %v234
    %v254 = vsel %vm244, %v240, 1326507024
    %v255 = vsel %vm243, %v237, %v254
    %v256 = vsel %vm242, %v253, %v255
    %v257 = vshll.u32 %v217, 8
    %v258 = vmul.u32.u64.compose %v257, %v256
    %v259 = vextract.low.u32 %v258
    %v260 = vextract.high.u32 %v258
    %v261 = vmul.u32.u64.compose %v257, %v252
    %v262 = vextract.low.u32 %v261
    %v263 = vextract.high.u32 %v261
    %v264 = vmul.u32 %v257, %v248
    %v265 = vadd.s32 %v260, %v262
    %vm266 = vc.u32 %v260, %v262
    %v267 = vadd.s32 %v263, 1
    %v268 = vsel %vm266, %v267, %v263
    %v269 = vadd.s32 %v264, %v268
    %v270 = vadd.s32 %v269, 536870912
    %v271 = vshrl.u32 %v270, 30
    %v272 = vshll.u32 %v271, 30
    %v273 = vsub.s32 %v269, %v272
    %vm274 = vcmp.lt.s32.totalorder %v273, 0
    %v275 = vsub.s32 0, %v273
    %v276 = vsel %vm274, %v275, %v273
    %v277 = vclz %v276
    %v278 = vsub.s32 %v277, 2
    %vm279 = vcmp.gt.s32.totalorder 0, %v278
    %v280 = vsel %vm279, 0, %v278
    %v281 = vsub.s32 32, %v280
    %v282 = vshll.u32 %v273, %v280
    %v283 = vshrl.u32 %v265, %v281
    %v284 = vor.u32 %v282, %v283
    %v285 = vsub.s32 4294967266, %v280
    %v286 = vadd.s32 %v285, 127
    %v287 = vshll.u32 %v286, 23
    %v288 = vor.u32 4788187, %v287
    %v289 = vand.u32 2147483647, %v288
    %v291 = vcvt.s32.f32 %v284
    %v292 = vmul.f32 %v291, %v289
    %v293 = vxor.u32 %v292, 2147483648
    %v294 = vsel %vm211, %v293, %v292
    %v295 = vsub.s32 4, %v271
    %v296 = vsel %vm211, %v295, %v271
    %v297 = vsel %vm210, %v99, %v294
    %v298 = vsel %vm210, 0, %v296
    %v299 = vcosq.f32.pop %v297
    %v300 = vsinq.f32.pop %v297
    %vm301 = vweird.f32 %v99
    %v302 = vand.u32 %v298, 3
    %vm303 = vcmp.lt.s32.totalorder %v302, 2
    %vm304 = vcmp.eq.s32.totalorder %v302, 0
    %v305 = vxor.u32 %v300, 2147483648
    %v306 = vsel %vm304, %v299, %v305
    %vm307 = vcmp.eq.s32.totalorder %v302, 2
    %v308 = vxor.u32 %v299, 2147483648
    %v309 = vsel %vm307, %v308, %v300
    %v310 = vsel %vm303, %v306, %v309
    %v311 = vsel %vm301, nan, %v310
    %v312 = vand.u32 2147483647, %v100
    %vm313 = vcmp.le.f32.partialorder %v312, 0.7853982
    %vm314 = vcmp.lt.s32.totalorder %v100, 0
    %v315 = vand.u32 %v100, 2139095040
    %v316 = vshrl.u32 %v315, 23
    %v317 = vsub.s32 %v316, 127
    %v318 = vand.u32 2147483647, %v100
    %v319 = vand.u32 %v318, 8388607
    %v320 = vor.u32 %v319, 8388608
    %v321 = vsub.s32 0, %v320
    %v322 = vadd.s32 %v317, 1
    %vm323 = vcmp.gt.s32.totalorder %v322, 0
    %v324 = vsel %vm323, %v322, 0
    %v325 = vshrl.u32 %v324, 5
    %v326 = vand.u32 %v324, 31
    %v327 = vsub.s32 32, %v326
    %v328 = vshrl.u32 683565275, %v327
    %v329 = vshll.u32 683565275, %v326
    %v330 = vshrl.u32 2475754826, %v327
    %v331 = vor.u32 %v329, %v330
    %v332 = vshll.u32 2475754826, %v326
    %v333 = vshrl.u32 2131351028, %v327
    %v334 = vor.u32 %v332, %v333
    %v335 = vshll.u32 2131351028, %v326
    %v336 = vshrl.u32 2102212464, %v327
    %v337 = vor.u32 %v335, %v336
    %v338 = vshll.u32 2102212464, %v326
    %v339 = vshrl.u32 920167782, %v327
    %v340 = vor.u32 %v338, %v339
    %v341 = vshll.u32 920167782, %v326
    %v342 = vshrl.u32 1326507024, %v327
    %v343 = vor.u32 %v341, %v342
    %vm344 = vcmp.lt.s32.totalorder %v325, 1
    %vm345 = vcmp.lt.s32.totalorder %v325, 2
    %vm346 = vcmp.lt.s32.totalorder %v325, 3
    %vm347 = vcmp.lt.s32.totalorder %v325, 4
    %v348 = vsel %vm344, %v328, %v331
    %v349 = vsel %vm347, %v337, 2102212464
    %v350 = vsel %vm346, %v334, %v349
    %v351 = vsel %vm345, %v348, %v350
    %v352 = vsel %vm344, %v331, %v334
    %v353 = vsel %vm347, %v340, 920167782
    %v354 = vsel %vm346, %v337, %v353
    %v355 = vsel %vm345, %v352, %v354
    %v356 = vsel %vm344, %v334, %v337
    %v357 = vsel %vm347, %v343, 1326507024
    %v358 = vsel %vm346, %v340, %v357
    %v359 = vsel %vm345, %v356, %v358
    %v360 = vshll.u32 %v320, 8
    %v361 = vmul.u32.u64.compose %v360, %v359
    %v362 = vextract.low.u32 %v361
    %v363 = vextract.high.u32 %v361
    %v364 = vmul.u32.u64.compose %v360, %v355
    %v365 = vextract.low.u32 %v364
    %v366 = vextract.high.u32 %v364
    %v367 = vmul.u32 %v360, %v351
    %v368 = vadd.s32 %v363, %v365
    %vm369 = vc.u32 %v363, %v365
    %v370 = vadd.s32 %v366, 1
    %v371 = vsel %vm369, %v370, %v366
    %v372 = vadd.s32 %v367, %v371
    %v373 = vadd.s32 %v372, 536870912
    %v374 = vshrl.u32 %v373, 30
    %v375 = vshll.u32 %v374, 30
    %v376 = vsub.s32 %v372, %v375
    %vm377 = vcmp.lt.s32.totalorder %v376, 0
    %v378 = vsub.s32 0, %v376
    %v379 = vsel %vm377, %v378, %v376
    %v380 = vclz %v379
    %v381 = vsub.s32 %v380, 2
    %vm382 = vcmp.gt.s32.totalorder 0, %v381
    %v383 = vsel %vm382, 0, %v381
    %v384 = vsub.s32 32, %v383
    %v385 = vshll.u32 %v376, %v383
    %v386 = vshrl.u32 %v368, %v384
    %v387 = vor.u32 %v385, %v386
    %v388 = vsub.s32 4294967266, %v383
    %v389 = vadd.s32 %v388, 127
    %v390 = vshll.u32 %v389, 23
    %v391 = vor.u32 4788187, %v390
    %v392 = vand.u32 2147483647, %v391
    %v394 = vcvt.s32.f32 %v387
    %v395 = vmul.f32 %v394, %v392
    %v396 = vxor.u32 %v395, 2147483648
    %v397 = vsel %vm314, %v396, %v395
    %v398 = vsub.s32 4, %v374
    %v399 = vsel %vm314, %v398, %v374
    %v400 = vsel %vm313, %v100, %v397
    %v401 = vsel %vm313, 0, %v399
    %v402 = vcosq.f32.pop %v400
    %v403 = vsinq.f32.pop %v400
    %vm404 = vweird.f32 %v100
    %v405 = vand.u32 %v401, 3
    %vm406 = vcmp.lt.s32.totalorder %v405, 2
    %vm407 = vcmp.eq.s32.totalorder %v405, 0
    %v408 = vxor.u32 %v403, 2147483648
    %v409 = vsel %vm407, %v402, %v408
    %vm410 = vcmp.eq.s32.totalorder %v405, 2
    %v411 = vxor.u32 %v402, 2147483648
    %v412 = vsel %vm410, %v411, %v403
    %v413 = vsel %vm406, %v409, %v412
    %v414 = vsel %vm404, nan, %v413
    %v415 = vand.u32 2147483647, %v101
    %vm416 = vcmp.le.f32.partialorder %v415, 0.7853982
    %vm417 = vcmp.lt.s32.totalorder %v101, 0
    %v418 = vand.u32 %v101, 2139095040
    %v419 = vshrl.u32 %v418, 23
    %v420 = vsub.s32 %v419, 127
    %v421 = vand.u32 2147483647, %v101
    %v422 = vand.u32 %v421, 8388607
    %v423 = vor.u32 %v422, 8388608
    %v424 = vsub.s32 0, %v423
    %v425 = vadd.s32 %v420, 1
    %vm426 = vcmp.gt.s32.totalorder %v425, 0
    %v427 = vsel %vm426, %v425, 0
    %v428 = vshrl.u32 %v427, 5
    %v429 = vand.u32 %v427, 31
    %v430 = vsub.s32 32, %v429
    %v431 = vshrl.u32 683565275, %v430
    %v432 = vshll.u32 683565275, %v429
    %v433 = vshrl.u32 2475754826, %v430
    %v434 = vor.u32 %v432, %v433
    %v435 = vshll.u32 2475754826, %v429
    %v436 = vshrl.u32 2131351028, %v430
    %v437 = vor.u32 %v435, %v436
    %v438 = vshll.u32 2131351028, %v429
    %v439 = vshrl.u32 2102212464, %v430
    %v440 = vor.u32 %v438, %v439
    %v441 = vshll.u32 2102212464, %v429
    %v442 = vshrl.u32 920167782, %v430
    %v443 = vor.u32 %v441, %v442
    %v444 = vshll.u32 920167782, %v429
    %v445 = vshrl.u32 1326507024, %v430
    %v446 = vor.u32 %v444, %v445
    %vm447 = vcmp.lt.s32.totalorder %v428, 1
    %vm448 = vcmp.lt.s32.totalorder %v428, 2
    %vm449 = vcmp.lt.s32.totalorder %v428, 3
    %vm450 = vcmp.lt.s32.totalorder %v428, 4
    %v451 = vsel %vm447, %v431, %v434
    %v452 = vsel %vm450, %v440, 2102212464
    %v453 = vsel %vm449, %v437, %v452
    %v454 = vsel %vm448, %v451, %v453
    %v455 = vsel %vm447, %v434, %v437
    %v456 = vsel %vm450, %v443, 920167782
    %v457 = vsel %vm449, %v440, %v456
    %v458 = vsel %vm448, %v455, %v457
    %v459 = vsel %vm447, %v437, %v440
    %v460 = vsel %vm450, %v446, 1326507024
    %v461 = vsel %vm449, %v443, %v460
    %v462 = vsel %vm448, %v459, %v461
    %v463 = vshll.u32 %v423, 8
    %v464 = vmul.u32.u64.compose %v463, %v462
    %v465 = vextract.low.u32 %v464
    %v466 = vextract.high.u32 %v464
    %v467 = vmul.u32.u64.compose %v463, %v458
    %v468 = vextract.low.u32 %v467
    %v469 = vextract.high.u32 %v467
    %v470 = vmul.u32 %v463, %v454
    %v471 = vadd.s32 %v466, %v468
    %vm472 = vc.u32 %v466, %v468
    %v473 = vadd.s32 %v469, 1
    %v474 = vsel %vm472, %v473, %v469
    %v475 = vadd.s32 %v470, %v474
    %v476 = vadd.s32 %v475, 536870912
    %v477 = vshrl.u32 %v476, 30
    %v478 = vshll.u32 %v477, 30
    %v479 = vsub.s32 %v475, %v478
    %vm480 = vcmp.lt.s32.totalorder %v479, 0
    %v481 = vsub.s32 0, %v479
    %v482 = vsel %vm480, %v481, %v479
    %v483 = vclz %v482
    %v484 = vsub.s32 %v483, 2
    %vm485 = vcmp.gt.s32.totalorder 0, %v484
    %v486 = vsel %vm485, 0, %v484
    %v487 = vsub.s32 32, %v486
    %v488 = vshll.u32 %v479, %v486
    %v489 = vshrl.u32 %v471, %v487
    %v490 = vor.u32 %v488, %v489
    %v491 = vsub.s32 4294967266, %v486
    %v492 = vadd.s32 %v491, 127
    %v493 = vshll.u32 %v492, 23
    %v494 = vor.u32 4788187, %v493
    %v495 = vand.u32 2147483647, %v494
    %v497 = vcvt.s32.f32 %v490
    %v498 = vmul.f32 %v497, %v495
    %v499 = vxor.u32 %v498, 2147483648
    %v500 = vsel %vm417, %v499, %v498
    %v501 = vsub.s32 4, %v477
    %v502 = vsel %vm417, %v501, %v477
    %v503 = vsel %vm416, %v101, %v500
    %v504 = vsel %vm416, 0, %v502
    %v505 = vcosq.f32.pop %v503
    %v506 = vsinq.f32.pop %v503
    %vm507 = vweird.f32 %v101
    %v508 = vand.u32 %v504, 3
    %vm509 = vcmp.lt.s32.totalorder %v508, 2
    %vm510 = vcmp.eq.s32.totalorder %v508, 0
    %v511 = vxor.u32 %v506, 2147483648
    %v512 = vsel %vm510, %v505, %v511
    %vm513 = vcmp.eq.s32.totalorder %v508, 2
    %v514 = vxor.u32 %v505, 2147483648
    %v515 = vsel %vm513, %v514, %v506
    %v516 = vsel %vm509, %v512, %v515
    %v517 = vsel %vm507, nan, %v516
    %v518 = vand.u32 2147483647, %v102
    %vm519 = vcmp.le.f32.partialorder %v518, 0.7853982
    %vm520 = vcmp.lt.s32.totalorder %v102, 0
    %v521 = vand.u32 %v102, 2139095040
    %v522 = vshrl.u32 %v521, 23
    %v523 = vsub.s32 %v522, 127
    %v524 = vand.u32 2147483647, %v102
    %v525 = vand.u32 %v524, 8388607
    %v526 = vor.u32 %v525, 8388608
    %v527 = vsub.s32 0, %v526
    %v528 = vadd.s32 %v523, 1
    %vm529 = vcmp.gt.s32.totalorder %v528, 0
    %v530 = vsel %vm529, %v528, 0
    %v531 = vshrl.u32 %v530, 5
    %v532 = vand.u32 %v530, 31
    %v533 = vsub.s32 32, %v532
    %v534 = vshrl.u32 683565275, %v533
    %v535 = vshll.u32 683565275, %v532
    %v536 = vshrl.u32 2475754826, %v533
    %v537 = vor.u32 %v535, %v536
    %v538 = vshll.u32 2475754826, %v532
    %v539 = vshrl.u32 2131351028, %v533
    %v540 = vor.u32 %v538, %v539
    %v541 = vshll.u32 2131351028, %v532
    %v542 = vshrl.u32 2102212464, %v533
    %v543 = vor.u32 %v541, %v542
    %v544 = vshll.u32 2102212464, %v532
    %v545 = vshrl.u32 920167782, %v533
    %v546 = vor.u32 %v544, %v545
    %v547 = vshll.u32 920167782, %v532
    %v548 = vshrl.u32 1326507024, %v533
    %v549 = vor.u32 %v547, %v548
    %vm550 = vcmp.lt.s32.totalorder %v531, 1
    %vm551 = vcmp.lt.s32.totalorder %v531, 2
    %vm552 = vcmp.lt.s32.totalorder %v531, 3
    %vm553 = vcmp.lt.s32.totalorder %v531, 4
    %v554 = vsel %vm550, %v534, %v537
    %v555 = vsel %vm553, %v543, 2102212464
    %v556 = vsel %vm552, %v540, %v555
    %v557 = vsel %vm551, %v554, %v556
    %v558 = vsel %vm550, %v537, %v540
    %v559 = vsel %vm553, %v546, 920167782
    %v560 = vsel %vm552, %v543, %v559
    %v561 = vsel %vm551, %v558, %v560
    %v562 = vsel %vm550, %v540, %v543
    %v563 = vsel %vm553, %v549, 1326507024
    %v564 = vsel %vm552, %v546, %v563
    %v565 = vsel %vm551, %v562, %v564
    %v566 = vshll.u32 %v526, 8
    %v567 = vmul.u32.u64.compose %v566, %v565
    %v568 = vextract.low.u32 %v567
    %v569 = vextract.high.u32 %v567
    %v570 = vmul.u32.u64.compose %v566, %v561
    %v571 = vextract.low.u32 %v570
    %v572 = vextract.high.u32 %v570
    %v573 = vmul.u32 %v566, %v557
    %v574 = vadd.s32 %v569, %v571
    %vm575 = vc.u32 %v569, %v571
    %v576 = vadd.s32 %v572, 1
    %v577 = vsel %vm575, %v576, %v572
    %v578 = vadd.s32 %v573, %v577
    %v579 = vadd.s32 %v578, 536870912
    %v580 = vshrl.u32 %v579, 30
    %v581 = vshll.u32 %v580, 30
    %v582 = vsub.s32 %v578, %v581
    %vm583 = vcmp.lt.s32.totalorder %v582, 0
    %v584 = vsub.s32 0, %v582
    %v585 = vsel %vm583, %v584, %v582
    %v586 = vclz %v585
    %v587 = vsub.s32 %v586, 2
    %vm588 = vcmp.gt.s32.totalorder 0, %v587
    %v589 = vsel %vm588, 0, %v587
    %v590 = vsub.s32 32, %v589
    %v591 = vshll.u32 %v582, %v589
    %v592 = vshrl.u32 %v574, %v590
    %v593 = vor.u32 %v591, %v592
    %v594 = vsub.s32 4294967266, %v589
    %v595 = vadd.s32 %v594, 127
    %v596 = vshll.u32 %v595, 23
    %v597 = vor.u32 4788187, %v596
    %v598 = vand.u32 2147483647, %v597
    %v600 = vcvt.s32.f32 %v593
    %v601 = vmul.f32 %v600, %v598
    %v602 = vxor.u32 %v601, 2147483648
    %v603 = vsel %vm520, %v602, %v601
    %v604 = vsub.s32 4, %v580
    %v605 = vsel %vm520, %v604, %v580
    %v606 = vsel %vm519, %v102, %v603
    %v607 = vsel %vm519, 0, %v605
    %v608 = vcosq.f32.pop %v606
    %v609 = vsinq.f32.pop %v606
    %vm610 = vweird.f32 %v102
    %v611 = vand.u32 %v607, 3
    %vm612 = vcmp.lt.s32.totalorder %v611, 2
    %vm613 = vcmp.eq.s32.totalorder %v611, 0
    %v614 = vxor.u32 %v609, 2147483648
    %v615 = vsel %vm613, %v608, %v614
    %vm616 = vcmp.eq.s32.totalorder %v611, 2
    %v617 = vxor.u32 %v608, 2147483648
    %v618 = vsel %vm616, %v617, %v609
    %v619 = vsel %vm612, %v615, %v618
    %v620 = vsel %vm610, nan, %v619
    %v621 = vand.u32 2147483647, %v103
    %vm622 = vcmp.le.f32.partialorder %v621, 0.7853982
    %vm623 = vcmp.lt.s32.totalorder %v103, 0
    %v624 = vand.u32 %v103, 2139095040
    %v625 = vshrl.u32 %v624, 23
    %v626 = vsub.s32 %v625, 127
    %v627 = vand.u32 2147483647, %v103
    %v628 = vand.u32 %v627, 8388607
    %v629 = vor.u32 %v628, 8388608
    %v630 = vsub.s32 0, %v629
    %v631 = vadd.s32 %v626, 1
    %vm632 = vcmp.gt.s32.totalorder %v631, 0
    %v633 = vsel %vm632, %v631, 0
    %v634 = vshrl.u32 %v633, 5
    %v635 = vand.u32 %v633, 31
    %v636 = vsub.s32 32, %v635
    %v637 = vshrl.u32 683565275, %v636
    %v638 = vshll.u32 683565275, %v635
    %v639 = vshrl.u32 2475754826, %v636
    %v640 = vor.u32 %v638, %v639
    %v641 = vshll.u32 2475754826, %v635
    %v642 = vshrl.u32 2131351028, %v636
    %v643 = vor.u32 %v641, %v642
    %v644 = vshll.u32 2131351028, %v635
    %v645 = vshrl.u32 2102212464, %v636
    %v646 = vor.u32 %v644, %v645
    %v647 = vshll.u32 2102212464, %v635
    %v648 = vshrl.u32 920167782, %v636
    %v649 = vor.u32 %v647, %v648
    %v650 = vshll.u32 920167782, %v635
    %v651 = vshrl.u32 1326507024, %v636
    %v652 = vor.u32 %v650, %v651
    %vm653 = vcmp.lt.s32.totalorder %v634, 1
    %vm654 = vcmp.lt.s32.totalorder %v634, 2
    %vm655 = vcmp.lt.s32.totalorder %v634, 3
    %vm656 = vcmp.lt.s32.totalorder %v634, 4
    %v657 = vsel %vm653, %v637, %v640
    %v658 = vsel %vm656, %v646, 2102212464
    %v659 = vsel %vm655, %v643, %v658
    %v660 = vsel %vm654, %v657, %v659
    %v661 = vsel %vm653, %v640, %v643
    %v662 = vsel %vm656, %v649, 920167782
    %v663 = vsel %vm655, %v646, %v662
    %v664 = vsel %vm654, %v661, %v663
    %v665 = vsel %vm653, %v643, %v646
    %v666 = vsel %vm656, %v652, 1326507024
    %v667 = vsel %vm655, %v649, %v666
    %v668 = vsel %vm654, %v665, %v667
    %v669 = vshll.u32 %v629, 8
    %v670 = vmul.u32.u64.compose %v669, %v668
    %v671 = vextract.low.u32 %v670
    %v672 = vextract.high.u32 %v670
    %v673 = vmul.u32.u64.compose %v669, %v664
    %v674 = vextract.low.u32 %v673
    %v675 = vextract.high.u32 %v673
    %v676 = vmul.u32 %v669, %v660
    %v677 = vadd.s32 %v672, %v674
    %vm678 = vc.u32 %v672, %v674
    %v679 = vadd.s32 %v675, 1
    %v680 = vsel %vm678, %v679, %v675
    %v681 = vadd.s32 %v676, %v680
    %v682 = vadd.s32 %v681, 536870912
    %v683 = vshrl.u32 %v682, 30
    %v684 = vshll.u32 %v683, 30
    %v685 = vsub.s32 %v681, %v684
    %vm686 = vcmp.lt.s32.totalorder %v685, 0
    %v687 = vsub.s32 0, %v685
    %v688 = vsel %vm686, %v687, %v685
    %v689 = vclz %v688
    %v690 = vsub.s32 %v689, 2
    %vm691 = vcmp.gt.s32.totalorder 0, %v690
    %v692 = vsel %vm691, 0, %v690
    %v693 = vsub.s32 32, %v692
    %v694 = vshll.u32 %v685, %v692
    %v695 = vshrl.u32 %v677, %v693
    %v696 = vor.u32 %v694, %v695
    %v697 = vsub.s32 4294967266, %v692
    %v698 = vadd.s32 %v697, 127
    %v699 = vshll.u32 %v698, 23
    %v700 = vor.u32 4788187, %v699
    %v701 = vand.u32 2147483647, %v700
    %v703 = vcvt.s32.f32 %v696
    %v704 = vmul.f32 %v703, %v701
    %v705 = vxor.u32 %v704, 2147483648
    %v706 = vsel %vm623, %v705, %v704
    %v707 = vsub.s32 4, %v683
    %v708 = vsel %vm623, %v707, %v683
    %v709 = vsel %vm622, %v103, %v706
    %v710 = vsel %vm622, 0, %v708
    %v711 = vcosq.f32.pop %v709
    %v712 = vsinq.f32.pop %v709
    %vm713 = vweird.f32 %v103
    %v714 = vand.u32 %v710, 3
    %vm715 = vcmp.lt.s32.totalorder %v714, 2
    %vm716 = vcmp.eq.s32.totalorder %v714, 0
    %v717 = vxor.u32 %v712, 2147483648
    %v718 = vsel %vm716, %v711, %v717
    %vm719 = vcmp.eq.s32.totalorder %v714, 2
    %v720 = vxor.u32 %v711, 2147483648
    %v721 = vsel %vm719, %v720, %v712
    %v722 = vsel %vm715, %v718, %v721
    %v723 = vsel %vm713, nan, %v722
    %v724 = vand.u32 2147483647, %v104
    %vm725 = vcmp.le.f32.partialorder %v724, 0.7853982
    %vm726 = vcmp.lt.s32.totalorder %v104, 0
    %v727 = vand.u32 %v104, 2139095040
    %v728 = vshrl.u32 %v727, 23
    %v729 = vsub.s32 %v728, 127
    %v730 = vand.u32 2147483647, %v104
    %v731 = vand.u32 %v730, 8388607
    %v732 = vor.u32 %v731, 8388608
    %v733 = vsub.s32 0, %v732
    %v734 = vadd.s32 %v729, 1
    %vm735 = vcmp.gt.s32.totalorder %v734, 0
    %v736 = vsel %vm735, %v734, 0
    %v737 = vshrl.u32 %v736, 5
    %v738 = vand.u32 %v736, 31
    %v739 = vsub.s32 32, %v738
    %v740 = vshrl.u32 683565275, %v739
    %v741 = vshll.u32 683565275, %v738
    %v742 = vshrl.u32 2475754826, %v739
    %v743 = vor.u32 %v741, %v742
    %v744 = vshll.u32 2475754826, %v738
    %v745 = vshrl.u32 2131351028, %v739
    %v746 = vor.u32 %v744, %v745
    %v747 = vshll.u32 2131351028, %v738
    %v748 = vshrl.u32 2102212464, %v739
    %v749 = vor.u32 %v747, %v748
    %v750 = vshll.u32 2102212464, %v738
    %v751 = vshrl.u32 920167782, %v739
    %v752 = vor.u32 %v750, %v751
    %v753 = vshll.u32 920167782, %v738
    %v754 = vshrl.u32 1326507024, %v739
    %v755 = vor.u32 %v753, %v754
    %vm756 = vcmp.lt.s32.totalorder %v737, 1
    %vm757 = vcmp.lt.s32.totalorder %v737, 2
    %vm758 = vcmp.lt.s32.totalorder %v737, 3
    %vm759 = vcmp.lt.s32.totalorder %v737, 4
    %v760 = vsel %vm756, %v740, %v743
    %v761 = vsel %vm759, %v749, 2102212464
    %v762 = vsel %vm758, %v746, %v761
    %v763 = vsel %vm757, %v760, %v762
    %v764 = vsel %vm756, %v743, %v746
    %v765 = vsel %vm759, %v752, 920167782
    %v766 = vsel %vm758, %v749, %v765
    %v767 = vsel %vm757, %v764, %v766
    %v768 = vsel %vm756, %v746, %v749
    %v769 = vsel %vm759, %v755, 1326507024
    %v770 = vsel %vm758, %v752, %v769
    %v771 = vsel %vm757, %v768, %v770
    %v772 = vshll.u32 %v732, 8
    %v773 = vmul.u32.u64.compose %v772, %v771
    %v774 = vextract.low.u32 %v773
    %v775 = vextract.high.u32 %v773
    %v776 = vmul.u32.u64.compose %v772, %v767
    %v777 = vextract.low.u32 %v776
    %v778 = vextract.high.u32 %v776
    %v779 = vmul.u32 %v772, %v763
    %v780 = vadd.s32 %v775, %v777
    %vm781 = vc.u32 %v775, %v777
    %v782 = vadd.s32 %v778, 1
    %v783 = vsel %vm781, %v782, %v778
    %v784 = vadd.s32 %v779, %v783
    %v785 = vadd.s32 %v784, 536870912
    %v786 = vshrl.u32 %v785, 30
    %v787 = vshll.u32 %v786, 30
    %v788 = vsub.s32 %v784, %v787
    %vm789 = vcmp.lt.s32.totalorder %v788, 0
    %v790 = vsub.s32 0, %v788
    %v791 = vsel %vm789, %v790, %v788
    %v792 = vclz %v791
    %v793 = vsub.s32 %v792, 2
    %vm794 = vcmp.gt.s32.totalorder 0, %v793
    %v795 = vsel %vm794, 0, %v793
    %v796 = vsub.s32 32, %v795
    %v797 = vshll.u32 %v788, %v795
    %v798 = vshrl.u32 %v780, %v796
    %v799 = vor.u32 %v797, %v798
    %v800 = vsub.s32 4294967266, %v795
    %v801 = vadd.s32 %v800, 127
    %v802 = vshll.u32 %v801, 23
    %v803 = vor.u32 4788187, %v802
    %v804 = vand.u32 2147483647, %v803
    %v806 = vcvt.s32.f32 %v799
    %v807 = vmul.f32 %v806, %v804
    %v808 = vxor.u32 %v807, 2147483648
    %v809 = vsel %vm726, %v808, %v807
    %v810 = vsub.s32 4, %v786
    %v811 = vsel %vm726, %v810, %v786
    %v812 = vsel %vm725, %v104, %v809
    %v813 = vsel %vm725, 0, %v811
    %v814 = vcosq.f32.pop %v812
    %v815 = vsinq.f32.pop %v812
    %vm816 = vweird.f32 %v104
    %v817 = vand.u32 %v813, 3
    %vm818 = vcmp.lt.s32.totalorder %v817, 2
    %vm819 = vcmp.eq.s32.totalorder %v817, 0
    %v820 = vxor.u32 %v815, 2147483648
    %v821 = vsel %vm819, %v814, %v820
    %vm822 = vcmp.eq.s32.totalorder %v817, 2
    %v823 = vxor.u32 %v814, 2147483648
    %v824 = vsel %vm822, %v823, %v815
    %v825 = vsel %vm818, %v821, %v824
    %v826 = vsel %vm816, nan, %v825
    %v827 = vand.u32 2147483647, %v105
    %vm828 = vcmp.le.f32.partialorder %v827, 0.7853982
    %vm829 = vcmp.lt.s32.totalorder %v105, 0
    %v830 = vand.u32 %v105, 2139095040
    %v831 = vshrl.u32 %v830, 23
    %v832 = vsub.s32 %v831, 127
    %v833 = vand.u32 2147483647, %v105
    %v834 = vand.u32 %v833, 8388607
    %v835 = vor.u32 %v834, 8388608
    %v836 = vsub.s32 0, %v835
    %v837 = vadd.s32 %v832, 1
    %vm838 = vcmp.gt.s32.totalorder %v837, 0
    %v839 = vsel %vm838, %v837, 0
    %v840 = vshrl.u32 %v839, 5
    %v841 = vand.u32 %v839, 31
    %v842 = vsub.s32 32, %v841
    %v843 = vshrl.u32 683565275, %v842
    %v844 = vshll.u32 683565275, %v841
    %v845 = vshrl.u32 2475754826, %v842
    %v846 = vor.u32 %v844, %v845
    %v847 = vshll.u32 2475754826, %v841
    %v848 = vshrl.u32 2131351028, %v842
    %v849 = vor.u32 %v847, %v848
    %v850 = vshll.u32 2131351028, %v841
    %v851 = vshrl.u32 2102212464, %v842
    %v852 = vor.u32 %v850, %v851
    %v853 = vshll.u32 2102212464, %v841
    %v854 = vshrl.u32 920167782, %v842
    %v855 = vor.u32 %v853, %v854
    %v856 = vshll.u32 920167782, %v841
    %v857 = vshrl.u32 1326507024, %v842
    %v858 = vor.u32 %v856, %v857
    %vm859 = vcmp.lt.s32.totalorder %v840, 1
    %vm860 = vcmp.lt.s32.totalorder %v840, 2
    %vm861 = vcmp.lt.s32.totalorder %v840, 3
    %vm862 = vcmp.lt.s32.totalorder %v840, 4
    %v863 = vsel %vm859, %v843, %v846
    %v864 = vsel %vm862, %v852, 2102212464
    %v865 = vsel %vm861, %v849, %v864
    %v866 = vsel %vm860, %v863, %v865
    %v867 = vsel %vm859, %v846, %v849
    %v868 = vsel %vm862, %v855, 920167782
    %v869 = vsel %vm861, %v852, %v868
    %v870 = vsel %vm860, %v867, %v869
    %v871 = vsel %vm859, %v849, %v852
    %v872 = vsel %vm862, %v858, 1326507024
    %v873 = vsel %vm861, %v855, %v872
    %v874 = vsel %vm860, %v871, %v873
    %v875 = vshll.u32 %v835, 8
    %v876 = vmul.u32.u64.compose %v875, %v874
    %v877 = vextract.low.u32 %v876
    %v878 = vextract.high.u32 %v876
    %v879 = vmul.u32.u64.compose %v875, %v870
    %v880 = vextract.low.u32 %v879
    %v881 = vextract.high.u32 %v879
    %v882 = vmul.u32 %v875, %v866
    %v883 = vadd.s32 %v878, %v880
    %vm884 = vc.u32 %v878, %v880
    %v885 = vadd.s32 %v881, 1
    %v886 = vsel %vm884, %v885, %v881
    %v887 = vadd.s32 %v882, %v886
    %v888 = vadd.s32 %v887, 536870912
    %v889 = vshrl.u32 %v888, 30
    %v890 = vshll.u32 %v889, 30
    %v891 = vsub.s32 %v887, %v890
    %vm892 = vcmp.lt.s32.totalorder %v891, 0
    %v893 = vsub.s32 0, %v891
    %v894 = vsel %vm892, %v893, %v891
    %v895 = vclz %v894
    %v896 = vsub.s32 %v895, 2
    %vm897 = vcmp.gt.s32.totalorder 0, %v896
    %v898 = vsel %vm897, 0, %v896
    %v899 = vsub.s32 32, %v898
    %v900 = vshll.u32 %v891, %v898
    %v901 = vshrl.u32 %v883, %v899
    %v902 = vor.u32 %v900, %v901
    %v903 = vsub.s32 4294967266, %v898
    %v904 = vadd.s32 %v903, 127
    %v905 = vshll.u32 %v904, 23
    %v906 = vor.u32 4788187, %v905
    %v907 = vand.u32 2147483647, %v906
    %v909 = vcvt.s32.f32 %v902
    %v910 = vmul.f32 %v909, %v907
    %v911 = vxor.u32 %v910, 2147483648
    %v912 = vsel %vm829, %v911, %v910
    %v913 = vsub.s32 4, %v889
    %v914 = vsel %vm829, %v913, %v889
    %v915 = vsel %vm828, %v105, %v912
    %v916 = vsel %vm828, 0, %v914
    %v917 = vcosq.f32.pop %v915
    %v918 = vsinq.f32.pop %v915
    %vm919 = vweird.f32 %v105
    %v920 = vand.u32 %v916, 3
    %vm921 = vcmp.lt.s32.totalorder %v920, 2
    %vm922 = vcmp.eq.s32.totalorder %v920, 0
    %v923 = vxor.u32 %v918, 2147483648
    %v924 = vsel %vm922, %v917, %v923
    %vm925 = vcmp.eq.s32.totalorder %v920, 2
    %v926 = vxor.u32 %v917, 2147483648
    %v927 = vsel %vm925, %v926, %v918
    %v928 = vsel %vm921, %v924, %v927
    %v929 = vsel %vm919, nan, %v928
    %v930 = vpack.c.bf16 %v311, %v208
    %v931 = vpack.c.bf16 %v517, %v414
    %v932 = vpack.c.bf16 %v723, %v620
    %v933 = vpack.c.bf16 %v929, %v826
    %v934 = vld [vmem:[%s6] sm:$0xf]
    %v935 = vld [vmem:[%s6 + $0x4] sm:$0xf]
    %v936 = vld [vmem:[%s6 + $0x8] sm:$0xf]
    %v937 = vld [vmem:[%s6 + $0xc] sm:$0xf]
    %v938 = vld [vmem:[%s6 + $0x10] sm:$0xf]
    %v939 = vld [vmem:[%s6 + $0x14] sm:$0xf]
    %v940 = vld [vmem:[%s6 + $0x18] sm:$0xf]
    %v941 = vld [vmem:[%s6 + $0x1c] sm:$0xf]
    %v942 = vld [vmem:[%s7] sm:$0x1]
    %v944 = vlaneseq
    %v945 = vshrl.u32 %v944, 7
    %v946 = vsub.s32 0, %v945
    %v947 = vrot.slane %v942, %v946
    %v957 = vunpack.c.l.b16 %v934
    %v958 = vunpack.c.l.b16 %v935
    %v959 = vunpack.c.l.b16 %v936
    %v960 = vunpack.c.l.b16 %v937
    %v961 = vunpack.c.l.b16 %v938
    %v962 = vunpack.c.l.b16 %v939
    %v963 = vunpack.c.l.b16 %v940
    %v964 = vunpack.c.l.b16 %v941
    %v965 = vpack.c.b16 %v958, %v957
    %v966 = vpack.c.b16 %v960, %v959
    %v967 = vpack.c.b16 %v962, %v961
    %v968 = vpack.c.b16 %v964, %v963
    %vm973 = vcmask 523264
    %v975 = vsel %vm973, %v930, 0
    %v978 = vsel %vm973, %v931, 0
    %v981 = vsel %vm973, %v932, 0
    %v984 = vsel %vm973, %v933, 0
    %986 = vmatprep.subr.bf16.mxu0 0
    %987 = vmatpush1.bf16.msra.mxu0 %v965
    %988 = vmatprep.subr.bf16.mxu0 0
    %989 = vmatpush1.bf16.msra.mxu0 %v966
    %990 = vmatprep.subr.bf16.mxu0 0
    %991 = vmatpush1.bf16.msra.mxu0 %v967
    %992 = vmatprep.subr.bf16.mxu0 0
    %993 = vmatpush1.bf16.msra.mxu0 %v968
    %994 = vmatprep.subr.bf16.mxu0 0
    %995 = vmatpush1.bf16.msra.mxu0 0
    %996 = vmatprep.subr.bf16.mxu0 0
    %997 = vmatpush1.bf16.msra.mxu0 0
    %998 = vmatprep.subr.bf16.mxu0 0
    %999 = vmatpush1.bf16.msra.mxu0 0
    %1000 = vmatprep.subr.bf16.mxu0 0
    %1001 = vmatpush1.bf16.msra.mxu0 0
    %1002 = vmatprep.subr.bf16.mxu0 0
    %1003 = vmatpush1.bf16.msra.mxu0 0
    %1004 = vmatprep.subr.bf16.mxu0 0
    %1005 = vmatpush1.bf16.msra.mxu0 0
    %1006 = vmatprep.subr.bf16.mxu0 0
    %1007 = vmatpush1.bf16.msra.mxu0 0
    %1008 = vmatprep.subr.bf16.mxu0 0
    %1009 = vmatpush1.bf16.msra.mxu0 0
    %1010 = vmatprep.subr.bf16.mxu0 0
    %1011 = vmatpush1.bf16.msra.mxu0 0
    %1012 = vmatprep.subr.bf16.mxu0 0
    %1013 = vmatpush1.bf16.msra.mxu0 0
    %1014 = vmatprep.subr.bf16.mxu0 0
    %1015 = vmatpush1.bf16.msra.mxu0 0
    %1016 = vmatprep.subr.bf16.mxu0 0
    %1017 = vmatpush1.bf16.msra.mxu0 0
    %1018 = vmatprep.mubr.bf16.mxu0 0
    %1019 = vmatmul.mubr.bf16.gmra.mrb[0].mxu0 %v975
    %v1020 = vpop.f32.mrb[0].mxu0
    %v1021 = vadd.f32 %v947, %v1020
    %v1022 = vpop.f32.mrb[0].mxu0
    %v1023 = vpop.f32.mrb[0].mxu0
    %v1024 = vadd.f32 %v947, %v1023
    %v1025 = vpop.f32.mrb[0].mxu0
    %1026 = vmatprep.mubr.bf16.mxu0 0
    %1027 = vmatmul.mubr.bf16.gmra.mrb[0].mxu0 %v978
    %v1028 = vpop.f32.mrb[0].mxu0
    %v1029 = vadd.f32 %v947, %v1028
    %v1030 = vpop.f32.mrb[0].mxu0
    %v1031 = vpop.f32.mrb[0].mxu0
    %v1032 = vadd.f32 %v947, %v1031
    %v1033 = vpop.f32.mrb[0].mxu0
    %1034 = vmatprep.mubr.bf16.mxu0 0
    %1035 = vmatmul.mubr.bf16.gmra.mrb[0].mxu0 %v981
    %v1036 = vpop.f32.mrb[0].mxu0
    %v1037 = vadd.f32 %v947, %v1036
    %v1038 = vpop.f32.mrb[0].mxu0
    %v1039 = vpop.f32.mrb[0].mxu0
    %v1040 = vadd.f32 %v947, %v1039
    %v1041 = vpop.f32.mrb[0].mxu0
    %1042 = vmatprep.mubr.bf16.mxu0 0
    %1043 = vmatmul.mubr.bf16.gmra.mrb[0].mxu0 %v984
    %v1044 = vpop.f32.mrb[0].mxu0
    %v1045 = vadd.f32 %v947, %v1044
    %v1046 = vpop.f32.mrb[0].mxu0
    %v1047 = vpop.f32.mrb[0].mxu0
    %v1048 = vadd.f32 %v947, %v1047
    %v1049 = vpop.f32.mrb[0].mxu0
    %1050 = vdwg.mxu0
    %v1051 = vmax.f32 %v1021, 0.0
    %v1052 = vmax.f32 %v1024, 0.0
    %v1053 = vmax.f32 %v1029, 0.0
    %v1054 = vmax.f32 %v1032, 0.0
    %v1055 = vmax.f32 %v1037, 0.0
    %v1056 = vmax.f32 %v1040, 0.0
    %v1057 = vmax.f32 %v1045, 0.0
    %v1058 = vmax.f32 %v1048, 0.0
    %v1059 = vld [vmem:[%s1] sm:$0xff]
    %v1060 = vpack.c.bf16 %v1059, %v1059
    %v1061 = vld [vmem:[%s4] sm:$0xf]
    %v1062 = vld [vmem:[%s4 + $0x4] sm:$0xf]
    %v1063 = vld [vmem:[%s5] sm:$0x1]
    %v1065 = vlaneseq
    %v1066 = vshrl.u32 %v1065, 7
    %v1067 = vsub.s32 0, %v1066
    %v1068 = vrot.slane %v1063, %v1067
    %v1072 = vunpack.c.l.b16 %v1061
    %v1073 = vunpack.c.l.b16 %v1062
    %v1074 = vpack.c.b16 %v1073, %v1072
    %vm1076 = vcmask 130048
    %v1078 = vsel %vm1076, %v1060, 0
    %1080 = vmatprep.subr.bf16.mxu0 0
    %1081 = vmatpush1.bf16.msra.mxu0 %v1074
    %1082 = vmatprep.subr.bf16.mxu0 0
    %1083 = vmatpush1.bf16.msra.mxu0 0
    %1084 = vmatprep.subr.bf16.mxu0 0
    %1085 = vmatpush1.bf16.msra.mxu0 0
    %1086 = vmatprep.subr.bf16.mxu0 0
    %1087 = vmatpush1.bf16.msra.mxu0 0
    %1088 = vmatprep.subr.bf16.mxu0 0
    %1089 = vmatpush1.bf16.msra.mxu0 0
    %1090 = vmatprep.subr.bf16.mxu0 0
    %1091 = vmatpush1.bf16.msra.mxu0 0
    %1092 = vmatprep.subr.bf16.mxu0 0
    %1093 = vmatpush1.bf16.msra.mxu0 0
    %1094 = vmatprep.subr.bf16.mxu0 0
    %1095 = vmatpush1.bf16.msra.mxu0 0
    %1096 = vmatprep.subr.bf16.mxu0 0
    %1097 = vmatpush1.bf16.msra.mxu0 0
    %1098 = vmatprep.subr.bf16.mxu0 0
    %1099 = vmatpush1.bf16.msra.mxu0 0
    %1100 = vmatprep.subr.bf16.mxu0 0
    %1101 = vmatpush1.bf16.msra.mxu0 0
    %1102 = vmatprep.subr.bf16.mxu0 0
    %1103 = vmatpush1.bf16.msra.mxu0 0
    %1104 = vmatprep.subr.bf16.mxu0 0
    %1105 = vmatpush1.bf16.msra.mxu0 0
    %1106 = vmatprep.subr.bf16.mxu0 0
    %1107 = vmatpush1.bf16.msra.mxu0 0
    %1108 = vmatprep.subr.bf16.mxu0 0
    %1109 = vmatpush1.bf16.msra.mxu0 0
    %1110 = vmatprep.subr.bf16.mxu0 0
    %1111 = vmatpush1.bf16.msra.mxu0 0
    %1112 = vmatprep.mubr.bf16.mxu0 0
    %1113 = vmatmul.mubr.bf16.gmra.mrb[0].mxu0 %v1078
    %v1114 = vpop.f32.mrb[0].mxu0
    %v1115 = vadd.f32 %v1068, %v1114
    %v1116 = vpop.f32.mrb[0].mxu0
    %v1117 = vpop.f32.mrb[0].mxu0
    %v1118 = vpop.f32.mrb[0].mxu0
    %1119 = vdwg.mxu0
    %v1120 = vmax.f32 %v1115, 0.0
    %v1121 = vld [vmem:[%s2] sm:$0xf]
    %v1122 = vld [vmem:[%s2 + $0x4] sm:$0xf]
    %v1123 = vld [vmem:[%s2 + $0x8] sm:$0xf]
    %v1124 = vld [vmem:[%s2 + $0xc] sm:$0xf]
    %v1125 = vld [vmem:[%s2 + $0x10] sm:$0xf]
    %v1126 = vld [vmem:[%s2 + $0x14] sm:$0xf]
    %v1127 = vld [vmem:[%s2 + $0x18] sm:$0xf]
    %v1128 = vld [vmem:[%s2 + $0x1c] sm:$0xf]
    %v1129 = vpack.c.bf16 %v1120, %v1120
    %v1138 = vunpack.c.l.b16 %v1121
    %v1139 = vunpack.c.l.b16 %v1122
    %v1140 = vunpack.c.l.b16 %v1123
    %v1141 = vunpack.c.l.b16 %v1124
    %v1142 = vunpack.c.l.b16 %v1125
    %v1143 = vunpack.c.l.b16 %v1126
    %v1144 = vunpack.c.l.b16 %v1127
    %v1145 = vunpack.c.l.b16 %v1128
    %v1146 = vpack.c.b16 %v1139, %v1138
    %v1147 = vpack.c.b16 %v1141, %v1140
    %v1148 = vpack.c.b16 %v1143, %v1142
    %v1149 = vpack.c.b16 %v1145, %v1144
    %vm1150 = vcmask 64512
    %v1152 = vsel %vm1150, %v1146, 0
    %v1155 = vsel %vm1150, %v1147, 0
    %v1158 = vsel %vm1150, %v1148, 0
    %v1161 = vsel %vm1150, %v1149, 0
    %vm1163 = vcmask 1043456
    %v1165 = vsel %vm1163, %v1129, 0
    %1167 = vmatprep.subr.bf16.mxu0 0
    %1168 = vmatpush1.bf16.msra.mxu0 %v1165
    %1169 = vmatprep.subr.bf16.mxu0 0
    %1170 = vmatpush1.bf16.msra.mxu0 0
    %1171 = vmatprep.subr.bf16.mxu0 0
    %1172 = vmatpush1.bf16.msra.mxu0 0
    %1173 = vmatprep.subr.bf16.mxu0 0
    %1174 = vmatpush1.bf16.msra.mxu0 0
    %1175 = vmatprep.subr.bf16.mxu0 0
    %1176 = vmatpush1.bf16.msra.mxu0 0
    %1177 = vmatprep.subr.bf16.mxu0 0
    %1178 = vmatpush1.bf16.msra.mxu0 0
    %1179 = vmatprep.subr.bf16.mxu0 0
    %1180 = vmatpush1.bf16.msra.mxu0 0
    %1181 = vmatprep.subr.bf16.mxu0 0
    %1182 = vmatpush1.bf16.msra.mxu0 0
    %1183 = vmatprep.subr.bf16.mxu0 0
    %1184 = vmatpush1.bf16.msra.mxu0 0
    %1185 = vmatprep.subr.bf16.mxu0 0
    %1186 = vmatpush1.bf16.msra.mxu0 0
    %1187 = vmatprep.subr.bf16.mxu0 0
    %1188 = vmatpush1.bf16.msra.mxu0 0
    %1189 = vmatprep.subr.bf16.mxu0 0
    %1190 = vmatpush1.bf16.msra.mxu0 0
    %1191 = vmatprep.subr.bf16.mxu0 0
    %1192 = vmatpush1.bf16.msra.mxu0 0
    %1193 = vmatprep.subr.bf16.mxu0 0
    %1194 = vmatpush1.bf16.msra.mxu0 0
    %1195 = vmatprep.subr.bf16.mxu0 0
    %1196 = vmatpush1.bf16.msra.mxu0 0
    %1197 = vmatprep.subr.bf16.mxu0 0
    %1198 = vmatpush1.bf16.msra.mxu0 0
    %1199 = vmatprep.mubr.bf16.mxu0 0
    %1200 = vmatmul.mubr.bf16.gmra.mrb[0].mxu0 %v1152
    %v1201 = vpop.f32.mrb[0].mxu0
    %v1202 = vadd.f32 0.0, %v1201
    %v1203 = vpop.f32.mrb[0].mxu0
    %v1204 = vpop.f32.mrb[0].mxu0
    %v1205 = vadd.f32 0.0, %v1204
    %v1206 = vpop.f32.mrb[0].mxu0
    %1207 = vmatprep.mubr.bf16.mxu0 0
    %1208 = vmatmul.mubr.bf16.gmra.mrb[0].mxu0 %v1155
    %v1209 = vpop.f32.mrb[0].mxu0
    %v1210 = vadd.f32 0.0, %v1209
    %v1211 = vpop.f32.mrb[0].mxu0
    %v1212 = vpop.f32.mrb[0].mxu0
    %v1213 = vadd.f32 0.0, %v1212
    %v1214 = vpop.f32.mrb[0].mxu0
    %1215 = vmatprep.mubr.bf16.mxu0 0
    %1216 = vmatmul.mubr.bf16.gmra.mrb[0].mxu0 %v1158
    %v1217 = vpop.f32.mrb[0].mxu0
    %v1218 = vadd.f32 0.0, %v1217
    %v1219 = vpop.f32.mrb[0].mxu0
    %v1220 = vpop.f32.mrb[0].mxu0
    %v1221 = vadd.f32 0.0, %v1220
    %v1222 = vpop.f32.mrb[0].mxu0
    %1223 = vmatprep.mubr.bf16.mxu0 0
    %1224 = vmatmul.mubr.bf16.gmra.mrb[0].mxu0 %v1161
    %v1225 = vpop.f32.mrb[0].mxu0
    %v1226 = vadd.f32 0.0, %v1225
    %v1227 = vpop.f32.mrb[0].mxu0
    %v1228 = vpop.f32.mrb[0].mxu0
    %v1229 = vadd.f32 0.0, %v1228
    %v1230 = vpop.f32.mrb[0].mxu0
    %1231 = vdwg.mxu0
    %v1232 = vmul.f32 %v1202, %v1051
    %v1233 = vmul.f32 %v1205, %v1052
    %v1234 = vmul.f32 %v1210, %v1053
    %v1235 = vmul.f32 %v1213, %v1054
    %v1236 = vmul.f32 %v1218, %v1055
    %v1237 = vmul.f32 %v1221, %v1056
    %v1238 = vmul.f32 %v1226, %v1057
    %v1239 = vmul.f32 %v1229, %v1058
    %v1240 = vpack.c.bf16 %v1233, %v1232
    %v1241 = vpack.c.bf16 %v1235, %v1234
    %v1242 = vpack.c.bf16 %v1237, %v1236
    %v1243 = vpack.c.bf16 %v1239, %v1238
    %v1244 = vld [vmem:[%s8] sm:$0xf]
    %v1245 = vld [vmem:[%s8 + $0x4] sm:$0xf]
    %v1246 = vld [vmem:[%s8 + $0x8] sm:$0xf]
    %v1247 = vld [vmem:[%s8 + $0xc] sm:$0xf]
    %v1248 = vld [vmem:[%s9] sm:$0x1]
    %v1250 = vlaneseq
    %v1251 = vshrl.u32 %v1250, 7
    %v1252 = vsub.s32 0, %v1251
    %v1253 = vrot.slane %v1248, %v1252
    %v1259 = vunpack.c.l.b16 %v1244
    %v1260 = vunpack.c.l.b16 %v1245
    %v1261 = vunpack.c.l.b16 %v1246
    %v1262 = vunpack.c.l.b16 %v1247
    %v1263 = vpack.c.b16 %v1260, %v1259
    %v1264 = vpack.c.b16 %v1262, %v1261
    %vm1267 = vcmask 261120
    %v1269 = vsel %vm1267, %v1240, 0
    %v1272 = vsel %vm1267, %v1241, 0
    %v1275 = vsel %vm1267, %v1242, 0
    %v1278 = vsel %vm1267, %v1243, 0
    %1280 = vmatprep.subr.bf16.mxu0 0
    %1281 = vmatpush1.bf16.msra.mxu0 %v1263
    %1282 = vmatprep.subr.bf16.mxu0 0
    %1283 = vmatpush1.bf16.msra.mxu0 %v1264
    %1284 = vmatprep.subr.bf16.mxu0 0
    %1285 = vmatpush1.bf16.msra.mxu0 0
    %1286 = vmatprep.subr.bf16.mxu0 0
    %1287 = vmatpush1.bf16.msra.mxu0 0
    %1288 = vmatprep.subr.bf16.mxu0 0
    %1289 = vmatpush1.bf16.msra.mxu0 0
    %1290 = vmatprep.subr.bf16.mxu0 0
    %1291 = vmatpush1.bf16.msra.mxu0 0
    %1292 = vmatprep.subr.bf16.mxu0 0
    %1293 = vmatpush1.bf16.msra.mxu0 0
    %1294 = vmatprep.subr.bf16.mxu0 0
    %1295 = vmatpush1.bf16.msra.mxu0 0
    %1296 = vmatprep.subr.bf16.mxu0 0
    %1297 = vmatpush1.bf16.msra.mxu0 0
    %1298 = vmatprep.subr.bf16.mxu0 0
    %1299 = vmatpush1.bf16.msra.mxu0 0
    %1300 = vmatprep.subr.bf16.mxu0 0
    %1301 = vmatpush1.bf16.msra.mxu0 0
    %1302 = vmatprep.subr.bf16.mxu0 0
    %1303 = vmatpush1.bf16.msra.mxu0 0
    %1304 = vmatprep.subr.bf16.mxu0 0
    %1305 = vmatpush1.bf16.msra.mxu0 0
    %1306 = vmatprep.subr.bf16.mxu0 0
    %1307 = vmatpush1.bf16.msra.mxu0 0
    %1308 = vmatprep.subr.bf16.mxu0 0
    %1309 = vmatpush1.bf16.msra.mxu0 0
    %1310 = vmatprep.subr.bf16.mxu0 0
    %1311 = vmatpush1.bf16.msra.mxu0 0
    %1312 = vmatprep.mubr.bf16.mxu0 0
    %1313 = vmatmul.mubr.bf16.gmra.mrb[0].mxu0 %v1269
    %v1314 = vpop.f32.mrb[0].mxu0
    %v1315 = vadd.f32 %v1253, %v1314
    %v1316 = vpop.f32.mrb[0].mxu0
    %v1317 = vpop.f32.mrb[0].mxu0
    %v1318 = vadd.f32 %v1253, %v1317
    %v1319 = vpop.f32.mrb[0].mxu0
    %1320 = vmatprep.mubr.bf16.mxu0 0
    %1321 = vmatmul.mubr.bf16.gmra.mrb[0].mxu0 %v1272
    %v1322 = vpop.f32.mrb[0].mxu0
    %v1323 = vadd.f32 %v1253, %v1322
    %v1324 = vpop.f32.mrb[0].mxu0
    %v1325 = vpop.f32.mrb[0].mxu0
    %v1326 = vadd.f32 %v1253, %v1325
    %v1327 = vpop.f32.mrb[0].mxu0
    %1328 = vmatprep.mubr.bf16.mxu0 0
    %1329 = vmatmul.mubr.bf16.gmra.mrb[0].mxu0 %v1275
    %v1330 = vpop.f32.mrb[0].mxu0
    %v1331 = vadd.f32 %v1253, %v1330
    %v1332 = vpop.f32.mrb[0].mxu0
    %v1333 = vpop.f32.mrb[0].mxu0
    %v1334 = vadd.f32 %v1253, %v1333
    %v1335 = vpop.f32.mrb[0].mxu0
    %1336 = vmatprep.mubr.bf16.mxu0 0
    %1337 = vmatmul.mubr.bf16.gmra.mrb[0].mxu0 %v1278
    %v1338 = vpop.f32.mrb[0].mxu0
    %v1339 = vadd.f32 %v1253, %v1338
    %v1340 = vpop.f32.mrb[0].mxu0
    %v1341 = vpop.f32.mrb[0].mxu0
    %v1342 = vadd.f32 %v1253, %v1341
    %v1343 = vpop.f32.mrb[0].mxu0
    %1344 = vdwg.mxu0
    %v1345 = vmax.f32 %v1315, 0.0
    %v1346 = vmax.f32 %v1318, 0.0
    %v1347 = vmax.f32 %v1323, 0.0
    %v1348 = vmax.f32 %v1326, 0.0
    %v1349 = vmax.f32 %v1331, 0.0
    %v1350 = vmax.f32 %v1334, 0.0
    %v1351 = vmax.f32 %v1339, 0.0
    %v1352 = vmax.f32 %v1342, 0.0
    %v1353 = vpack.c.bf16 %v1346, %v1345
    %v1354 = vpack.c.bf16 %v1348, %v1347
    %v1355 = vpack.c.bf16 %v1350, %v1349
    %v1356 = vpack.c.bf16 %v1352, %v1351
    %v1357 = vld [vmem:[%s10] sm:$0xf]
    %v1358 = vld [vmem:[%s10 + $0x4] sm:$0xf]
    %v1359 = vld [vmem:[%s10 + $0x8] sm:$0xf]
    %v1360 = vld [vmem:[%s10 + $0xc] sm:$0xf]
    %v1361 = vld [vmem:[%s11] sm:$0x1]
    %v1363 = vlaneseq
    %v1364 = vshrl.u32 %v1363, 7
    %v1365 = vsub.s32 0, %v1364
    %v1366 = vrot.slane %v1361, %v1365
    %v1372 = vunpack.c.l.b16 %v1357
    %v1373 = vunpack.c.l.b16 %v1358
    %v1374 = vunpack.c.l.b16 %v1359
    %v1375 = vunpack.c.l.b16 %v1360
    %v1376 = vpack.c.b16 %v1373, %v1372
    %v1377 = vpack.c.b16 %v1375, %v1374
    %v1381 = vsel %vm1267, %v1353, 0
    %v1384 = vsel %vm1267, %v1354, 0
    %v1387 = vsel %vm1267, %v1355, 0
    %v1390 = vsel %vm1267, %v1356, 0
    %1392 = vmatprep.subr.bf16.mxu0 0
    %1393 = vmatpush1.bf16.msra.mxu0 %v1376
    %1394 = vmatprep.subr.bf16.mxu0 0
    %1395 = vmatpush1.bf16.msra.mxu0 %v1377
    %1396 = vmatprep.subr.bf16.mxu0 0
    %1397 = vmatpush1.bf16.msra.mxu0 0
    %1398 = vmatprep.subr.bf16.mxu0 0
    %1399 = vmatpush1.bf16.msra.mxu0 0
    %1400 = vmatprep.subr.bf16.mxu0 0
    %1401 = vmatpush1.bf16.msra.mxu0 0
    %1402 = vmatprep.subr.bf16.mxu0 0
    %1403 = vmatpush1.bf16.msra.mxu0 0
    %1404 = vmatprep.subr.bf16.mxu0 0
    %1405 = vmatpush1.bf16.msra.mxu0 0
    %1406 = vmatprep.subr.bf16.mxu0 0
    %1407 = vmatpush1.bf16.msra.mxu0 0
    %1408 = vmatprep.subr.bf16.mxu0 0
    %1409 = vmatpush1.bf16.msra.mxu0 0
    %1410 = vmatprep.subr.bf16.mxu0 0
    %1411 = vmatpush1.bf16.msra.mxu0 0
    %1412 = vmatprep.subr.bf16.mxu0 0
    %1413 = vmatpush1.bf16.msra.mxu0 0
    %1414 = vmatprep.subr.bf16.mxu0 0
    %1415 = vmatpush1.bf16.msra.mxu0 0
    %1416 = vmatprep.subr.bf16.mxu0 0
    %1417 = vmatpush1.bf16.msra.mxu0 0
    %1418 = vmatprep.subr.bf16.mxu0 0
    %1419 = vmatpush1.bf16.msra.mxu0 0
    %1420 = vmatprep.subr.bf16.mxu0 0
    %1421 = vmatpush1.bf16.msra.mxu0 0
    %1422 = vmatprep.subr.bf16.mxu0 0
    %1423 = vmatpush1.bf16.msra.mxu0 0
    %1424 = vmatprep.mubr.bf16.mxu0 0
    %1425 = vmatmul.mubr.bf16.gmra.mrb[0].mxu0 %v1381
    %v1426 = vpop.f32.mrb[0].mxu0
    %v1427 = vadd.f32 %v1366, %v1426
    %v1428 = vpop.f32.mrb[0].mxu0
    %v1429 = vpop.f32.mrb[0].mxu0
    %v1430 = vadd.f32 %v1366, %v1429
    %v1431 = vpop.f32.mrb[0].mxu0
    %1432 = vmatprep.mubr.bf16.mxu0 0
    %1433 = vmatmul.mubr.bf16.gmra.mrb[0].mxu0 %v1384
    %v1434 = vpop.f32.mrb[0].mxu0
    %v1435 = vadd.f32 %v1366, %v1434
    %v1436 = vpop.f32.mrb[0].mxu0
    %v1437 = vpop.f32.mrb[0].mxu0
    %v1438 = vadd.f32 %v1366, %v1437
    %v1439 = vpop.f32.mrb[0].mxu0
    %1440 = vmatprep.mubr.bf16.mxu0 0
    %1441 = vmatmul.mubr.bf16.gmra.mrb[0].mxu0 %v1387
    %v1442 = vpop.f32.mrb[0].mxu0
    %v1443 = vadd.f32 %v1366, %v1442
    %v1444 = vpop.f32.mrb[0].mxu0
    %v1445 = vpop.f32.mrb[0].mxu0
    %v1446 = vadd.f32 %v1366, %v1445
    %v1447 = vpop.f32.mrb[0].mxu0
    %1448 = vmatprep.mubr.bf16.mxu0 0
    %1449 = vmatmul.mubr.bf16.gmra.mrb[0].mxu0 %v1390
    %v1450 = vpop.f32.mrb[0].mxu0
    %v1451 = vadd.f32 %v1366, %v1450
    %v1452 = vpop.f32.mrb[0].mxu0
    %v1453 = vpop.f32.mrb[0].mxu0
    %v1454 = vadd.f32 %v1366, %v1453
    %v1455 = vpop.f32.mrb[0].mxu0
    %1456 = vdwg.mxu0
    %v1457 = vpack.c.bf16 %v1430, %v1427
    %v1458 = vpack.c.bf16 %v1438, %v1435
    %v1459 = vpack.c.bf16 %v1446, %v1443
    %v1460 = vpack.c.bf16 %v1454, %v1451
    %v1465 = vunpack.c.l.b16 %v1457
    %v1466 = vunpack.c.h.b16 %v1457
    %v1467 = vunpack.c.l.b16 %v1458
    %v1468 = vunpack.c.h.b16 %v1458
    %v1469 = vunpack.c.l.b16 %v1459
    %v1470 = vunpack.c.h.b16 %v1459
    %v1471 = vunpack.c.l.b16 %v1460
    %v1472 = vunpack.c.h.b16 %v1460
    %v1473 = vpack.c.b16 %v1465, %v1465
    %v1474 = vpack.c.b16 %v1466, %v1466
    %v1475 = vpack.c.b16 %v1467, %v1467
    %v1476 = vpack.c.b16 %v1468, %v1468
    %v1477 = vpack.c.b16 %v1469, %v1469
    %v1478 = vpack.c.b16 %v1470, %v1470
    %v1479 = vpack.c.b16 %v1471, %v1471
    %v1480 = vpack.c.b16 %v1472, %v1472
    %1489 = vst [vmem:[#allocation2] sm:$0xf] %v1473
    %1490 = vst [vmem:[#allocation2 + $0x4] sm:$0xf] %v1474
    %1491 = vst [vmem:[#allocation2 + $0x8] sm:$0xf] %v1475
    %1492 = vst [vmem:[#allocation2 + $0xc] sm:$0xf] %v1476
    %1493 = vst [vmem:[#allocation2 + $0x10] sm:$0xf] %v1477
    %1494 = vst [vmem:[#allocation2 + $0x14] sm:$0xf] %v1478
    %1495 = vst [vmem:[#allocation2 + $0x18] sm:$0xf] %v1479
    %1496 = vst [vmem:[#allocation2 + $0x1c] sm:$0xf] %v1480
    // Predicated region
    $region50: #{tpu_custom_call.1} parent=1 // pred_check
      _
    $region51: #{tpu_custom_call.1} parent=1 // pred_check_branch
      %1498 = sbr.rel (0) target = $region53
    $region52: #{tpu_custom_call.1} parent=1 // pred_region
      %s1500 = ssub.s32 512, 512
      %1501 = vsyncadd [#allocation3], %s1500
      %s1502 = sshll.u32 [#allocation2], 4
      %s1503 = int_to_ptr.vmem [resolvable:$true] %s1502
      %1508 = dma.vmem_to_hbm [thread:$0]  %s1503, 512, %s12, [#allocation3], 64, 64, 4
    $region53: #{tpu_custom_call.1} parent=1 // pred_fallthru
      _
    // Predicated region
    $region54: #{tpu_custom_call.1} parent=1 // pred_check
      _
    $region55: #{tpu_custom_call.1} parent=1 // pred_check_branch
      %1510 = sbr.rel (0) target = $region57
    $region56: #{tpu_custom_call.1} parent=1 // pred_region
      %1511 = dma.done [#allocation3], 512
    $region57: #{tpu_custom_call.1} parent=1 // pred_fallthru
      _
    %1512 = vsyncpa [#allocation3], 1

</llo_original>
